<compile_context>
chip_gen: v5e
topology: v5e:2x2
jax: 0.10.0
libtpu: 0.0.40
codegen_flags: <defaults>
</compile_context>

<pallas_src>
import functools

import jax
import jax.numpy as jnp
import numpy as np
from jax import lax
from jax.experimental import pallas as pl
from jax.experimental.pallas import tpu as pltpu


# ----------------------------- Pallas kernel ------------------------------ #
def _make_encoder_lstm_kernel(num_layers, seq_len, b_pad, hidden):
    """Builds the fused multi-layer LSTM kernel.

    Kernel ref layout (positional):
      refs[0]                    : x_ref   (S, Bp, E)   embedded input sequence
      refs[1 : 1+3L]             : per layer l: w_ih_t (in_dim, 4H),
                                                w_hh_t (H, 4H),
                                                bias   (1, 4H)   (= b_ih + b_hh)
      refs[1+3L], refs[2+3L]     : hN_ref, cN_ref   (L, Bp, H)   outputs
      refs[3+3L:]                : seq_sc (S, Bp, H)   inter-layer sequence
                                   gx_sc  (S, Bp, 4H)  hoisted input gates
                                   h_sc   (Bp, H)      recurrent hidden state
                                   c_sc   (Bp, H)      recurrent cell state
    """
    H = hidden

    def kernel(*refs):
        x_ref = refs[0]
        w_refs = refs[1:1 + 3 * num_layers]
        hN_ref = refs[1 + 3 * num_layers]
        cN_ref = refs[2 + 3 * num_layers]
        seq_sc, gx_sc, h_sc, c_sc = refs[3 + 3 * num_layers:]

        for l in range(num_layers):
            wih = w_refs[3 * l][...]        # (in_dim, 4H)
            whh = w_refs[3 * l + 1][...]    # (H, 4H)
            bias = w_refs[3 * l + 2][...]   # (1, 4H)

            # Layer input sequence: embedded tokens for layer 0, previous
            # layer's hidden outputs (kept in VMEM scratch) otherwise.
            if l == 0:
                xin = x_ref[...]            # (S, Bp, E)
            else:
                xin = seq_sc[...]           # (S, Bp, H)
            in_dim = xin.shape[-1]

            # Hoisted input projection: one big MXU matmul for all timesteps.
            gx = jnp.dot(xin.reshape(seq_len * b_pad, in_dim), wih,
                         preferred_element_type=jnp.float32) + bias
            gx_sc[...] = gx.reshape(seq_len, b_pad, 4 * H)

            # PyTorch default: zero initial (h0, c0).
            h_sc[...] = jnp.zeros_like(h_sc)
            c_sc[...] = jnp.zeros_like(c_sc)

            write_seq = (l + 1 < num_layers)   # last layer's sequence is unused

            def step(t, carry, whh=whh, write_seq=write_seq):
                h = h_sc[...]
                c = c_sc[...]
                # Serial part of the recurrence: only the hidden projection.
                gates = gx_sc[t] + jnp.dot(h, whh,
                                           preferred_element_type=jnp.float32)
                # Two full-width (128-lane) EUP passes instead of 4 narrow ones.
                sig = jax.nn.sigmoid(gates)
                th = jnp.tanh(gates)
                i_g = sig[:, 0 * H:1 * H]       # PyTorch gate order: i, f, g, o
                f_g = sig[:, 1 * H:2 * H]
                g_g = th[:, 2 * H:3 * H]
                o_g = sig[:, 3 * H:4 * H]
                c_new = f_g * c + i_g * g_g
                h_new = o_g * jnp.tanh(c_new)
                h_sc[...] = h_new
                c_sc[...] = c_new
                if write_seq:
                    seq_sc[t] = h_new
                return carry

            lax.fori_loop(0, seq_len, step, 0, unroll=True)

            hN_ref[l] = h_sc[...]
            cN_ref[l] = c_sc[...]

    return kernel


def encoder_lstm(emb, lstm_params):
    """Fused multi-layer LSTM.

    emb         : (S, B, E) float32 embedded sequence.
    lstm_params : list of dicts with keys w_ih_t (in_dim,4H), w_hh_t (H,4H),
                  bias (1,4H).
    Returns (hidden, cell), each (num_layers, B, H) float32.
    """
    S, B, E = emb.shape
    H = lstm_params[0]["w_hh_t"].shape[0]
    L = len(lstm_params)

    # Sublane-pad batch to a multiple of 8 so (B, H)/(B, 4H) tiles are dense.
    b_pad = int(-(-B // 8) * 8)
    if b_pad != B:
        emb = jnp.pad(emb, ((0, 0), (0, b_pad - B), (0, 0)))

    flat_w = []
    for lp in lstm_params:
        flat_w += [lp["w_ih_t"], lp["w_hh_t"], lp["bias"]]

    vmem = pl.BlockSpec(memory_space=pltpu.MemorySpace.VMEM)
    out_shape = (
        jax.ShapeDtypeStruct((L, b_pad, H), jnp.float32),   # final hidden
        jax.ShapeDtypeStruct((L, b_pad, H), jnp.float32),   # final cell
    )

    # Advisory cost estimate for the XLA scheduler.
    flops = 0
    for lp in lstm_params:
        in_dim = lp["w_ih_t"].shape[0]
        flops += 2 * S * b_pad * (in_dim + H) * 4 * H   # matmuls
        flops += 12 * S * b_pad * H                     # gate elementwise
    transcendentals = L * S * b_pad * 9 * H
    bytes_accessed = 4 * (emb.size + sum(int(w.size) for w in flat_w)
                          + 2 * L * b_pad * H)

    kernel = _make_encoder_lstm_kernel(L, S, b_pad, H)
    hN, cN = pl.pallas_call(
        kernel,
        out_shape=out_shape,
        in_specs=[vmem] * (1 + 3 * L),
        out_specs=(vmem, vmem),
        scratch_shapes=[
            pltpu.VMEM((S, b_pad, H), jnp.float32),       # inter-layer sequence
            pltpu.VMEM((S, b_pad, 4 * H), jnp.float32),   # hoisted input gates
            pltpu.VMEM((b_pad, H), jnp.float32),          # h state
            pltpu.VMEM((b_pad, H), jnp.float32),          # c state
        ],
        cost_estimate=pl.CostEstimate(flops=int(flops),
                                      transcendentals=int(transcendentals),
                                      bytes_accessed=int(bytes_accessed)),
        compiler_params=pltpu.CompilerParams(
            vmem_limit_bytes=32 * 1024 * 1024),
    )(emb, *flat_w)

    return hN[:, :B, :], cN[:, :B, :]


# ------------------------------- Encoder ----------------------------------- #
def init_encoder_params(key, input_size, embedding_size, hidden_size, num_layers):
    """Synthetic parameters matching nn.Embedding + nn.LSTM, stored in the
    layout the kernel wants: pre-transposed weights, pre-fused biases."""
    params = {}
    key, k_emb = jax.random.split(key)
    params["embedding"] = jax.random.normal(
        k_emb, (input_size, embedding_size), jnp.float32)   # N(0,1) like nn.Embedding

    params["lstm"] = []
    for layer in range(num_layers):
        in_dim = embedding_size if layer == 0 else hidden_size
        bound = 1.0 / np.sqrt(hidden_size)
        key, k1, k2, k3, k4 = jax.random.split(key, 5)
        w_ih = jax.random.uniform(k1, (4 * hidden_size, in_dim),
                                  jnp.float32, -bound, bound)
        w_hh = jax.random.uniform(k2, (4 * hidden_size, hidden_size),
                                  jnp.float32, -bound, bound)
        b_ih = jax.random.uniform(k3, (4 * hidden_size,),
                                  jnp.float32, -bound, bound)
        b_hh = jax.random.uniform(k4, (4 * hidden_size,),
                                  jnp.float32, -bound, bound)
        params["lstm"].append({
            "w_ih_t": jnp.transpose(w_ih),                       # (in_dim, 4H)
            "w_hh_t": jnp.transpose(w_hh),                       # (H, 4H)
            "bias": (b_ih + b_hh).reshape(1, 4 * hidden_size),   # (1, 4H)
        })
    return params


@jax.jit
def encoder_forward(params, x):
    """x: (S, B) int32 token ids -> (hidden, cell), each (num_layers, B, H)."""
    # Embedding lookup (glue: gather is not the hot path).
    emb = jnp.take(params["embedding"], x, axis=0)          # (S, B, E)
    # Dropout: identity in eval mode.  TODO(synk): training-mode dropout.
    return encoder_lstm(emb, params["lstm"])


# Pure-JAX reference (lax.scan LSTM) for a correctness sanity check.
def encoder_reference(params, x):
    emb = jnp.take(params["embedding"], x, axis=0)
    layer_in = emb
    hiddens, cells = [], []
    for lp in params["lstm"]:
        H = lp["w_hh_t"].shape[0]
        B = x.shape[1]

        def step(carry, x_t, lp=lp, H=H):
            h, c = carry
            gates = x_t @ lp["w_ih_t"] + h @ lp["w_hh_t"] + lp["bias"]
            i_g = jax.nn.sigmoid(gates[:, 0 * H:1 * H])
            f_g = jax.nn.sigmoid(gates[:, 1 * H:2 * H])
            g_g = jnp.tanh(gates[:, 2 * H:3 * H])
            o_g = jax.nn.sigmoid(gates[:, 3 * H:4 * H])
            c_new = f_g * c + i_g * g_g
            h_new = o_g * jnp.tanh(c_new)
            return (h_new, c_new), h_new

        init = (jnp.zeros((B, H), jnp.float32), jnp.zeros((B, H), jnp.float32))
        (h_n, c_n), out_seq = lax.scan(step, init, layer_in)
        layer_in = out_seq
        hiddens.append(h_n)
        cells.append(c_n)
    return jnp.stack(hiddens, 0), jnp.stack(cells, 0)


if __name__ == "__main__":
    INPUT_SIZE = 50       # vocab
    EMBEDDING_SIZE = 32
    HIDDEN_SIZE = 32
    NUM_LAYERS = 2
    SEQ_LEN = 8
    BATCH = 4

    key = jax.random.PRNGKey(0)
    key, k_params, k_x = jax.random.split(key, 3)
    params = init_encoder_params(k_params, INPUT_SIZE, EMBEDDING_SIZE,
                                 HIDDEN_SIZE, NUM_LAYERS)
    x = jax.random.randint(k_x, (SEQ_LEN, BATCH), 0, INPUT_SIZE, dtype=jnp.int32)

    hidden, cell = encoder_forward(params, x)
    jax.block_until_ready((hidden, cell))

    assert hidden.shape == (NUM_LAYERS, BATCH, HIDDEN_SIZE)
    assert cell.shape == (NUM_LAYERS, BATCH, HIDDEN_SIZE)

    # Sanity check vs pure-JAX reference.
    h_ref, c_ref = encoder_reference(params, x)
    np.testing.assert_allclose(np.asarray(hidden), np.asarray(h_ref),
                               rtol=1e-4, atol=1e-4)
    np.testing.assert_allclose(np.asarray(cell), np.asarray(c_ref),
                               rtol=1e-4, atol=1e-4)

    print("KERNEL_OK")
</pallas_src>

<mosaic_0001>
module attributes {stable_mosaic.version = 11 : i64} {
  func.func @kernel(%arg0: memref<8x8x32xf32, #tpu.memory_space<vmem>>, %arg1: memref<32x128xf32, #tpu.memory_space<vmem>>, %arg2: memref<32x128xf32, #tpu.memory_space<vmem>>, %arg3: memref<1x128xf32, #tpu.memory_space<vmem>>, %arg4: memref<32x128xf32, #tpu.memory_space<vmem>>, %arg5: memref<32x128xf32, #tpu.memory_space<vmem>>, %arg6: memref<1x128xf32, #tpu.memory_space<vmem>>, %arg7: memref<2x8x32xf32, #tpu.memory_space<vmem>>, %arg8: memref<2x8x32xf32, #tpu.memory_space<vmem>>, %arg9: memref<8x8x32xf32, #tpu.memory_space<vmem>>, %arg10: memref<8x8x128xf32, #tpu.memory_space<vmem>>, %arg11: memref<8x32xf32, #tpu.memory_space<vmem>>, %arg12: memref<8x32xf32, #tpu.memory_space<vmem>>) attributes {dimension_semantics = [], scalar_prefetch = 0 : i64, scratch_operands = 4 : i64, tpu.core_type = #tpu.core_type<tc>} {
    %c0 = arith.constant 0 : index
    %c0_0 = arith.constant 0 : index
    %0 = vector.load %arg1[%c0, %c0_0] : memref<32x128xf32, #tpu.memory_space<vmem>>, vector<32x128xf32>
    %c0_1 = arith.constant 0 : index
    %c0_2 = arith.constant 0 : index
    %1 = vector.load %arg2[%c0_1, %c0_2] : memref<32x128xf32, #tpu.memory_space<vmem>>, vector<32x128xf32>
    %c0_3 = arith.constant 0 : index
    %c0_4 = arith.constant 0 : index
    %2 = vector.load %arg3[%c0_3, %c0_4] : memref<1x128xf32, #tpu.memory_space<vmem>>, vector<1x128xf32>
    %c0_5 = arith.constant 0 : index
    %c0_6 = arith.constant 0 : index
    %c0_7 = arith.constant 0 : index
    %3 = vector.load %arg0[%c0_5, %c0_6, %c0_7] : memref<8x8x32xf32, #tpu.memory_space<vmem>>, vector<8x8x32xf32>
    %4 = vector.shape_cast %3 : vector<8x8x32xf32> to vector<64x32xf32>
    %cst = arith.constant dense<0.000000e+00> : vector<64x128xf32>
    %5 = tpu.matmul %4, %0, %cst {dimension_numbers = #tpu.dot_dimension_numbers<[1], [0], [0], [1], [0, 0, 1, 1], [], []>} : vector<64x32xf32>, vector<32x128xf32>, vector<64x128xf32> -> vector<64x128xf32>
    %6 = vector.broadcast %2 : vector<1x128xf32> to vector<64x128xf32>
    %7 = arith.addf %5, %6 : vector<64x128xf32>
    %8 = vector.shape_cast %7 : vector<64x128xf32> to vector<8x8x128xf32>
    %c0_8 = arith.constant 0 : index
    %c0_9 = arith.constant 0 : index
    %c0_10 = arith.constant 0 : index
    %9 = vector.load %arg10[%c0_8, %c0_9, %c0_10] : memref<8x8x128xf32, #tpu.memory_space<vmem>>, vector<8x8x128xf32>
    tpu.vector_store %arg10[%c0_8, %c0_9, %c0_10], %8 {strides = array<i32>} : memref<8x8x128xf32, #tpu.memory_space<vmem>>, vector<8x8x128xf32>,
    %cst_11 = arith.constant 0.000000e+00 : f32
    %10 = vector.broadcast %cst_11 : f32 to vector<8x32xf32>
    %c0_12 = arith.constant 0 : index
    %c0_13 = arith.constant 0 : index
    %11 = vector.load %arg11[%c0_12, %c0_13] : memref<8x32xf32, #tpu.memory_space<vmem>>, vector<8x32xf32>
    tpu.vector_store %arg11[%c0_12, %c0_13], %10 {strides = array<i32>} : memref<8x32xf32, #tpu.memory_space<vmem>>, vector<8x32xf32>,
    %cst_14 = arith.constant 0.000000e+00 : f32
    %12 = vector.broadcast %cst_14 : f32 to vector<8x32xf32>
    %c0_15 = arith.constant 0 : index
    %c0_16 = arith.constant 0 : index
    %13 = vector.load %arg12[%c0_15, %c0_16] : memref<8x32xf32, #tpu.memory_space<vmem>>, vector<8x32xf32>
    tpu.vector_store %arg12[%c0_15, %c0_16], %12 {strides = array<i32>} : memref<8x32xf32, #tpu.memory_space<vmem>>, vector<8x32xf32>,
    %c0_i32 = arith.constant 0 : i32
    %c0_17 = arith.constant 0 : index
    %c0_18 = arith.constant 0 : index
    %14 = vector.load %arg11[%c0_17, %c0_18] : memref<8x32xf32, #tpu.memory_space<vmem>>, vector<8x32xf32>
    %c0_19 = arith.constant 0 : index
    %c0_20 = arith.constant 0 : index
    %15 = vector.load %arg12[%c0_19, %c0_20] : memref<8x32xf32, #tpu.memory_space<vmem>>, vector<8x32xf32>
    %16 = arith.index_cast %c0_i32 : i32 to index
    %c0_21 = arith.constant 0 : index
    %c0_22 = arith.constant 0 : index
    %17 = vector.load %arg10[%16, %c0_21, %c0_22] : memref<8x8x128xf32, #tpu.memory_space<vmem>>, vector<1x8x128xf32>
    %18 = vector.shape_cast %17 : vector<1x8x128xf32> to vector<8x128xf32>
    %cst_23 = arith.constant dense<0.000000e+00> : vector<8x128xf32>
    %19 = tpu.matmul %14, %1, %cst_23 {dimension_numbers = #tpu.dot_dimension_numbers<[1], [0], [0], [1], [0, 0, 1, 1], [], []>} : vector<8x32xf32>, vector<32x128xf32>, vector<8x128xf32> -> vector<8x128xf32>
    %20 = arith.addf %18, %19 : vector<8x128xf32>
    %21 = arith.negf %20 : vector<8x128xf32>
    %22 = math.exp %21 : vector<8x128xf32>
    %cst_24 = arith.constant 1.000000e+00 : f32
    %23 = vector.broadcast %cst_24 : f32 to vector<8x128xf32>
    %24 = arith.addf %23, %22 : vector<8x128xf32>
    %25 = arith.divf %23, %24 : vector<8x128xf32>
    %26 = math.tanh %20 : vector<8x128xf32>
    %27 = vector.extract_strided_slice %25 {offsets = [0, 0], sizes = [8, 32], strides = [1, 1]} : vector<8x128xf32> to vector<8x32xf32>
    %28 = vector.extract_strided_slice %25 {offsets = [0, 32], sizes = [8, 32], strides = [1, 1]} : vector<8x128xf32> to vector<8x32xf32>
    %29 = vector.extract_strided_slice %26 {offsets = [0, 64], sizes = [8, 32], strides = [1, 1]} : vector<8x128xf32> to vector<8x32xf32>
    %30 = vector.extract_strided_slice %25 {offsets = [0, 96], sizes = [8, 32], strides = [1, 1]} : vector<8x128xf32> to vector<8x32xf32>
    %31 = arith.mulf %28, %15 : vector<8x32xf32>
    %32 = arith.mulf %27, %29 : vector<8x32xf32>
    %33 = arith.addf %31, %32 : vector<8x32xf32>
    %34 = math.tanh %33 : vector<8x32xf32>
    %35 = arith.mulf %30, %34 : vector<8x32xf32>
    %c0_25 = arith.constant 0 : index
    %c0_26 = arith.constant 0 : index
    %36 = vector.load %arg11[%c0_25, %c0_26] : memref<8x32xf32, #tpu.memory_space<vmem>>, vector<8x32xf32>
    tpu.vector_store %arg11[%c0_25, %c0_26], %35 {strides = array<i32>} : memref<8x32xf32, #tpu.memory_space<vmem>>, vector<8x32xf32>,
    %c0_27 = arith.constant 0 : index
    %c0_28 = arith.constant 0 : index
    %37 = vector.load %arg12[%c0_27, %c0_28] : memref<8x32xf32, #tpu.memory_space<vmem>>, vector<8x32xf32>
    tpu.vector_store %arg12[%c0_27, %c0_28], %33 {strides = array<i32>} : memref<8x32xf32, #tpu.memory_space<vmem>>, vector<8x32xf32>,
    %38 = arith.index_cast %c0_i32 : i32 to index
    %c0_29 = arith.constant 0 : index
    %c0_30 = arith.constant 0 : index
    %39 = vector.load %arg9[%38, %c0_29, %c0_30] : memref<8x8x32xf32, #tpu.memory_space<vmem>>, vector<1x8x32xf32>
    %40 = vector.shape_cast %39 : vector<1x8x32xf32> to vector<8x32xf32>
    %41 = vector.shape_cast %35 : vector<8x32xf32> to vector<1x8x32xf32>
    tpu.vector_store %arg9[%38, %c0_29, %c0_30], %41 {strides = array<i32>} : memref<8x8x32xf32, #tpu.memory_space<vmem>>, vector<1x8x32xf32>,
    %c1_i32 = arith.constant 1 : i32
    %c0_31 = arith.constant 0 : index
    %c0_32 = arith.constant 0 : index
    %42 = vector.load %arg11[%c0_31, %c0_32] : memref<8x32xf32, #tpu.memory_space<vmem>>, vector<8x32xf32>
    %c0_33 = arith.constant 0 : index
    %c0_34 = arith.constant 0 : index
    %43 = vector.load %arg12[%c0_33, %c0_34] : memref<8x32xf32, #tpu.memory_space<vmem>>, vector<8x32xf32>
    %44 = arith.index_cast %c1_i32 : i32 to index
    %c0_35 = arith.constant 0 : index
    %c0_36 = arith.constant 0 : index
    %45 = vector.load %arg10[%44, %c0_35, %c0_36] : memref<8x8x128xf32, #tpu.memory_space<vmem>>, vector<1x8x128xf32>
    %46 = vector.shape_cast %45 : vector<1x8x128xf32> to vector<8x128xf32>
    %cst_37 = arith.constant dense<0.000000e+00> : vector<8x128xf32>
    %47 = tpu.matmul %42, %1, %cst_37 {dimension_numbers = #tpu.dot_dimension_numbers<[1], [0], [0], [1], [0, 0, 1, 1], [], []>} : vector<8x32xf32>, vector<32x128xf32>, vector<8x128xf32> -> vector<8x128xf32>
    %48 = arith.addf %46, %47 : vector<8x128xf32>
    %49 = arith.negf %48 : vector<8x128xf32>
    %50 = math.exp %49 : vector<8x128xf32>
    %cst_38 = arith.constant 1.000000e+00 : f32
    %51 = vector.broadcast %cst_38 : f32 to vector<8x128xf32>
    %52 = arith.addf %51, %50 : vector<8x128xf32>
    %53 = arith.divf %51, %52 : vector<8x128xf32>
    %54 = math.tanh %48 : vector<8x128xf32>
    %55 = vector.extract_strided_slice %53 {offsets = [0, 0], sizes = [8, 32], strides = [1, 1]} : vector<8x128xf32> to vector<8x32xf32>
    %56 = vector.extract_strided_slice %53 {offsets = [0, 32], sizes = [8, 32], strides = [1, 1]} : vector<8x128xf32> to vector<8x32xf32>
    %57 = vector.extract_strided_slice %54 {offsets = [0, 64], sizes = [8, 32], strides = [1, 1]} : vector<8x128xf32> to vector<8x32xf32>
    %58 = vector.extract_strided_slice %53 {offsets = [0, 96], sizes = [8, 32], strides = [1, 1]} : vector<8x128xf32> to vector<8x32xf32>
    %59 = arith.mulf %56, %43 : vector<8x32xf32>
    %60 = arith.mulf %55, %57 : vector<8x32xf32>
    %61 = arith.addf %59, %60 : vector<8x32xf32>
    %62 = math.tanh %61 : vector<8x32xf32>
    %63 = arith.mulf %58, %62 : vector<8x32xf32>
    %c0_39 = arith.constant 0 : index
    %c0_40 = arith.constant 0 : index
    %64 = vector.load %arg11[%c0_39, %c0_40] : memref<8x32xf32, #tpu.memory_space<vmem>>, vector<8x32xf32>
    tpu.vector_store %arg11[%c0_39, %c0_40], %63 {strides = array<i32>} : memref<8x32xf32, #tpu.memory_space<vmem>>, vector<8x32xf32>,
    %c0_41 = arith.constant 0 : index
    %c0_42 = arith.constant 0 : index
    %65 = vector.load %arg12[%c0_41, %c0_42] : memref<8x32xf32, #tpu.memory_space<vmem>>, vector<8x32xf32>
    tpu.vector_store %arg12[%c0_41, %c0_42], %61 {strides = array<i32>} : memref<8x32xf32, #tpu.memory_space<vmem>>, vector<8x32xf32>,
    %66 = arith.index_cast %c1_i32 : i32 to index
    %c0_43 = arith.constant 0 : index
    %c0_44 = arith.constant 0 : index
    %67 = vector.load %arg9[%66, %c0_43, %c0_44] : memref<8x8x32xf32, #tpu.memory_space<vmem>>, vector<1x8x32xf32>
    %68 = vector.shape_cast %67 : vector<1x8x32xf32> to vector<8x32xf32>
    %69 = vector.shape_cast %63 : vector<8x32xf32> to vector<1x8x32xf32>
    tpu.vector_store %arg9[%66, %c0_43, %c0_44], %69 {strides = array<i32>} : memref<8x8x32xf32, #tpu.memory_space<vmem>>, vector<1x8x32xf32>,
    %c2_i32 = arith.constant 2 : i32
    %c0_45 = arith.constant 0 : index
    %c0_46 = arith.constant 0 : index
    %70 = vector.load %arg11[%c0_45, %c0_46] : memref<8x32xf32, #tpu.memory_space<vmem>>, vector<8x32xf32>
    %c0_47 = arith.constant 0 : index
    %c0_48 = arith.constant 0 : index
    %71 = vector.load %arg12[%c0_47, %c0_48] : memref<8x32xf32, #tpu.memory_space<vmem>>, vector<8x32xf32>
    %72 = arith.index_cast %c2_i32 : i32 to index
    %c0_49 = arith.constant 0 : index
    %c0_50 = arith.constant 0 : index
    %73 = vector.load %arg10[%72, %c0_49, %c0_50] : memref<8x8x128xf32, #tpu.memory_space<vmem>>, vector<1x8x128xf32>
    %74 = vector.shape_cast %73 : vector<1x8x128xf32> to vector<8x128xf32>
    %cst_51 = arith.constant dense<0.000000e+00> : vector<8x128xf32>
    %75 = tpu.matmul %70, %1, %cst_51 {dimension_numbers = #tpu.dot_dimension_numbers<[1], [0], [0], [1], [0, 0, 1, 1], [], []>} : vector<8x32xf32>, vector<32x128xf32>, vector<8x128xf32> -> vector<8x128xf32>
    %76 = arith.addf %74, %75 : vector<8x128xf32>
    %77 = arith.negf %76 : vector<8x128xf32>
    %78 = math.exp %77 : vector<8x128xf32>
    %cst_52 = arith.constant 1.000000e+00 : f32
    %79 = vector.broadcast %cst_52 : f32 to vector<8x128xf32>
    %80 = arith.addf %79, %78 : vector<8x128xf32>
    %81 = arith.divf %79, %80 : vector<8x128xf32>
    %82 = math.tanh %76 : vector<8x128xf32>
    %83 = vector.extract_strided_slice %81 {offsets = [0, 0], sizes = [8, 32], strides = [1, 1]} : vector<8x128xf32> to vector<8x32xf32>
    %84 = vector.extract_strided_slice %81 {offsets = [0, 32], sizes = [8, 32], strides = [1, 1]} : vector<8x128xf32> to vector<8x32xf32>
    %85 = vector.extract_strided_slice %82 {offsets = [0, 64], sizes = [8, 32], strides = [1, 1]} : vector<8x128xf32> to vector<8x32xf32>
    %86 = vector.extract_strided_slice %81 {offsets = [0, 96], sizes = [8, 32], strides = [1, 1]} : vector<8x128xf32> to vector<8x32xf32>
    %87 = arith.mulf %84, %71 : vector<8x32xf32>
    %88 = arith.mulf %83, %85 : vector<8x32xf32>
    %89 = arith.addf %87, %88 : vector<8x32xf32>
    %90 = math.tanh %89 : vector<8x32xf32>
    %91 = arith.mulf %86, %90 : vector<8x32xf32>
    %c0_53 = arith.constant 0 : index
    %c0_54 = arith.constant 0 : index
    %92 = vector.load %arg11[%c0_53, %c0_54] : memref<8x32xf32, #tpu.memory_space<vmem>>, vector<8x32xf32>
    tpu.vector_store %arg11[%c0_53, %c0_54], %91 {strides = array<i32>} : memref<8x32xf32, #tpu.memory_space<vmem>>, vector<8x32xf32>,
    %c0_55 = arith.constant 0 : index
    %c0_56 = arith.constant 0 : index
    %93 = vector.load %arg12[%c0_55, %c0_56] : memref<8x32xf32, #tpu.memory_space<vmem>>, vector<8x32xf32>
    tpu.vector_store %arg12[%c0_55, %c0_56], %89 {strides = array<i32>} : memref<8x32xf32, #tpu.memory_space<vmem>>, vector<8x32xf32>,
    %94 = arith.index_cast %c2_i32 : i32 to index
    %c0_57 = arith.constant 0 : index
    %c0_58 = arith.constant 0 : index
    %95 = vector.load %arg9[%94, %c0_57, %c0_58] : memref<8x8x32xf32, #tpu.memory_space<vmem>>, vector<1x8x32xf32>
    %96 = vector.shape_cast %95 : vector<1x8x32xf32> to vector<8x32xf32>
    %97 = vector.shape_cast %91 : vector<8x32xf32> to vector<1x8x32xf32>
    tpu.vector_store %arg9[%94, %c0_57, %c0_58], %97 {strides = array<i32>} : memref<8x8x32xf32, #tpu.memory_space<vmem>>, vector<1x8x32xf32>,
    %c3_i32 = arith.constant 3 : i32
    %c0_59 = arith.constant 0 : index
    %c0_60 = arith.constant 0 : index
    %98 = vector.load %arg11[%c0_59, %c0_60] : memref<8x32xf32, #tpu.memory_space<vmem>>, vector<8x32xf32>
    %c0_61 = arith.constant 0 : index
    %c0_62 = arith.constant 0 : index
    %99 = vector.load %arg12[%c0_61, %c0_62] : memref<8x32xf32, #tpu.memory_space<vmem>>, vector<8x32xf32>
    %100 = arith.index_cast %c3_i32 : i32 to index
    %c0_63 = arith.constant 0 : index
    %c0_64 = arith.constant 0 : index
    %101 = vector.load %arg10[%100, %c0_63, %c0_64] : memref<8x8x128xf32, #tpu.memory_space<vmem>>, vector<1x8x128xf32>
    %102 = vector.shape_cast %101 : vector<1x8x128xf32> to vector<8x128xf32>
    %cst_65 = arith.constant dense<0.000000e+00> : vector<8x128xf32>
    %103 = tpu.matmul %98, %1, %cst_65 {dimension_numbers = #tpu.dot_dimension_numbers<[1], [0], [0], [1], [0, 0, 1, 1], [], []>} : vector<8x32xf32>, vector<32x128xf32>, vector<8x128xf32> -> vector<8x128xf32>
    %104 = arith.addf %102, %103 : vector<8x128xf32>
    %105 = arith.negf %104 : vector<8x128xf32>
    %106 = math.exp %105 : vector<8x128xf32>
    %cst_66 = arith.constant 1.000000e+00 : f32
    %107 = vector.broadcast %cst_66 : f32 to vector<8x128xf32>
    %108 = arith.addf %107, %106 : vector<8x128xf32>
    %109 = arith.divf %107, %108 : vector<8x128xf32>
    %110 = math.tanh %104 : vector<8x128xf32>
    %111 = vector.extract_strided_slice %109 {offsets = [0, 0], sizes = [8, 32], strides = [1, 1]} : vector<8x128xf32> to vector<8x32xf32>
    %112 = vector.extract_strided_slice %109 {offsets = [0, 32], sizes = [8, 32], strides = [1, 1]} : vector<8x128xf32> to vector<8x32xf32>
    %113 = vector.extract_strided_slice %110 {offsets = [0, 64], sizes = [8, 32], strides = [1, 1]} : vector<8x128xf32> to vector<8x32xf32>
    %114 = vector.extract_strided_slice %109 {offsets = [0, 96], sizes = [8, 32], strides = [1, 1]} : vector<8x128xf32> to vector<8x32xf32>
    %115 = arith.mulf %112, %99 : vector<8x32xf32>
    %116 = arith.mulf %111, %113 : vector<8x32xf32>
    %117 = arith.addf %115, %116 : vector<8x32xf32>
    %118 = math.tanh %117 : vector<8x32xf32>
    %119 = arith.mulf %114, %118 : vector<8x32xf32>
    %c0_67 = arith.constant 0 : index
    %c0_68 = arith.constant 0 : index
    %120 = vector.load %arg11[%c0_67, %c0_68] : memref<8x32xf32, #tpu.memory_space<vmem>>, vector<8x32xf32>
    tpu.vector_store %arg11[%c0_67, %c0_68], %119 {strides = array<i32>} : memref<8x32xf32, #tpu.memory_space<vmem>>, vector<8x32xf32>,
    %c0_69 = arith.constant 0 : index
    %c0_70 = arith.constant 0 : index
    %121 = vector.load %arg12[%c0_69, %c0_70] : memref<8x32xf32, #tpu.memory_space<vmem>>, vector<8x32xf32>
    tpu.vector_store %arg12[%c0_69, %c0_70], %117 {strides = array<i32>} : memref<8x32xf32, #tpu.memory_space<vmem>>, vector<8x32xf32>,
    %122 = arith.index_cast %c3_i32 : i32 to index
    %c0_71 = arith.constant 0 : index
    %c0_72 = arith.constant 0 : index
    %123 = vector.load %arg9[%122, %c0_71, %c0_72] : memref<8x8x32xf32, #tpu.memory_space<vmem>>, vector<1x8x32xf32>
    %124 = vector.shape_cast %123 : vector<1x8x32xf32> to vector<8x32xf32>
    %125 = vector.shape_cast %119 : vector<8x32xf32> to vector<1x8x32xf32>
    tpu.vector_store %arg9[%122, %c0_71, %c0_72], %125 {strides = array<i32>} : memref<8x8x32xf32, #tpu.memory_space<vmem>>, vector<1x8x32xf32>,
    %c4_i32 = arith.constant 4 : i32
    %c0_73 = arith.constant 0 : index
    %c0_74 = arith.constant 0 : index
    %126 = vector.load %arg11[%c0_73, %c0_74] : memref<8x32xf32, #tpu.memory_space<vmem>>, vector<8x32xf32>
    %c0_75 = arith.constant 0 : index
    %c0_76 = arith.constant 0 : index
    %127 = vector.load %arg12[%c0_75, %c0_76] : memref<8x32xf32, #tpu.memory_space<vmem>>, vector<8x32xf32>
    %128 = arith.index_cast %c4_i32 : i32 to index
    %c0_77 = arith.constant 0 : index
    %c0_78 = arith.constant 0 : index
    %129 = vector.load %arg10[%128, %c0_77, %c0_78] : memref<8x8x128xf32, #tpu.memory_space<vmem>>, vector<1x8x128xf32>
    %130 = vector.shape_cast %129 : vector<1x8x128xf32> to vector<8x128xf32>
    %cst_79 = arith.constant dense<0.000000e+00> : vector<8x128xf32>
    %131 = tpu.matmul %126, %1, %cst_79 {dimension_numbers = #tpu.dot_dimension_numbers<[1], [0], [0], [1], [0, 0, 1, 1], [], []>} : vector<8x32xf32>, vector<32x128xf32>, vector<8x128xf32> -> vector<8x128xf32>
    %132 = arith.addf %130, %131 : vector<8x128xf32>
    %133 = arith.negf %132 : vector<8x128xf32>
    %134 = math.exp %133 : vector<8x128xf32>
    %cst_80 = arith.constant 1.000000e+00 : f32
    %135 = vector.broadcast %cst_80 : f32 to vector<8x128xf32>
    %136 = arith.addf %135, %134 : vector<8x128xf32>
    %137 = arith.divf %135, %136 : vector<8x128xf32>
    %138 = math.tanh %132 : vector<8x128xf32>
    %139 = vector.extract_strided_slice %137 {offsets = [0, 0], sizes = [8, 32], strides = [1, 1]} : vector<8x128xf32> to vector<8x32xf32>
    %140 = vector.extract_strided_slice %137 {offsets = [0, 32], sizes = [8, 32], strides = [1, 1]} : vector<8x128xf32> to vector<8x32xf32>
    %141 = vector.extract_strided_slice %138 {offsets = [0, 64], sizes = [8, 32], strides = [1, 1]} : vector<8x128xf32> to vector<8x32xf32>
    %142 = vector.extract_strided_slice %137 {offsets = [0, 96], sizes = [8, 32], strides = [1, 1]} : vector<8x128xf32> to vector<8x32xf32>
    %143 = arith.mulf %140, %127 : vector<8x32xf32>
    %144 = arith.mulf %139, %141 : vector<8x32xf32>
    %145 = arith.addf %143, %144 : vector<8x32xf32>
    %146 = math.tanh %145 : vector<8x32xf32>
    %147 = arith.mulf %142, %146 : vector<8x32xf32>
    %c0_81 = arith.constant 0 : index
    %c0_82 = arith.constant 0 : index
    %148 = vector.load %arg11[%c0_81, %c0_82] : memref<8x32xf32, #tpu.memory_space<vmem>>, vector<8x32xf32>
    tpu.vector_store %arg11[%c0_81, %c0_82], %147 {strides = array<i32>} : memref<8x32xf32, #tpu.memory_space<vmem>>, vector<8x32xf32>,
    %c0_83 = arith.constant 0 : index
    %c0_84 = arith.constant 0 : index
    %149 = vector.load %arg12[%c0_83, %c0_84] : memref<8x32xf32, #tpu.memory_space<vmem>>, vector<8x32xf32>
    tpu.vector_store %arg12[%c0_83, %c0_84], %145 {strides = array<i32>} : memref<8x32xf32, #tpu.memory_space<vmem>>, vector<8x32xf32>,
    %150 = arith.index_cast %c4_i32 : i32 to index
    %c0_85 = arith.constant 0 : index
    %c0_86 = arith.constant 0 : index
    %151 = vector.load %arg9[%150, %c0_85, %c0_86] : memref<8x8x32xf32, #tpu.memory_space<vmem>>, vector<1x8x32xf32>
    %152 = vector.shape_cast %151 : vector<1x8x32xf32> to vector<8x32xf32>
    %153 = vector.shape_cast %147 : vector<8x32xf32> to vector<1x8x32xf32>
    tpu.vector_store %arg9[%150, %c0_85, %c0_86], %153 {strides = array<i32>} : memref<8x8x32xf32, #tpu.memory_space<vmem>>, vector<1x8x32xf32>,
    %c5_i32 = arith.constant 5 : i32
    %c0_87 = arith.constant 0 : index
    %c0_88 = arith.constant 0 : index
    %154 = vector.load %arg11[%c0_87, %c0_88] : memref<8x32xf32, #tpu.memory_space<vmem>>, vector<8x32xf32>
    %c0_89 = arith.constant 0 : index
    %c0_90 = arith.constant 0 : index
    %155 = vector.load %arg12[%c0_89, %c0_90] : memref<8x32xf32, #tpu.memory_space<vmem>>, vector<8x32xf32>
    %156 = arith.index_cast %c5_i32 : i32 to index
    %c0_91 = arith.constant 0 : index
    %c0_92 = arith.constant 0 : index
    %157 = vector.load %arg10[%156, %c0_91, %c0_92] : memref<8x8x128xf32, #tpu.memory_space<vmem>>, vector<1x8x128xf32>
    %158 = vector.shape_cast %157 : vector<1x8x128xf32> to vector<8x128xf32>
    %cst_93 = arith.constant dense<0.000000e+00> : vector<8x128xf32>
    %159 = tpu.matmul %154, %1, %cst_93 {dimension_numbers = #tpu.dot_dimension_numbers<[1], [0], [0], [1], [0, 0, 1, 1], [], []>} : vector<8x32xf32>, vector<32x128xf32>, vector<8x128xf32> -> vector<8x128xf32>
    %160 = arith.addf %158, %159 : vector<8x128xf32>
    %161 = arith.negf %160 : vector<8x128xf32>
    %162 = math.exp %161 : vector<8x128xf32>
    %cst_94 = arith.constant 1.000000e+00 : f32
    %163 = vector.broadcast %cst_94 : f32 to vector<8x128xf32>
    %164 = arith.addf %163, %162 : vector<8x128xf32>
    %165 = arith.divf %163, %164 : vector<8x128xf32>
    %166 = math.tanh %160 : vector<8x128xf32>
    %167 = vector.extract_strided_slice %165 {offsets = [0, 0], sizes = [8, 32], strides = [1, 1]} : vector<8x128xf32> to vector<8x32xf32>
    %168 = vector.extract_strided_slice %165 {offsets = [0, 32], sizes = [8, 32], strides = [1, 1]} : vector<8x128xf32> to vector<8x32xf32>
    %169 = vector.extract_strided_slice %166 {offsets = [0, 64], sizes = [8, 32], strides = [1, 1]} : vector<8x128xf32> to vector<8x32xf32>
    %170 = vector.extract_strided_slice %165 {offsets = [0, 96], sizes = [8, 32], strides = [1, 1]} : vector<8x128xf32> to vector<8x32xf32>
    %171 = arith.mulf %168, %155 : vector<8x32xf32>
    %172 = arith.mulf %167, %169 : vector<8x32xf32>
    %173 = arith.addf %171, %172 : vector<8x32xf32>
    %174 = math.tanh %173 : vector<8x32xf32>
    %175 = arith.mulf %170, %174 : vector<8x32xf32>
    %c0_95 = arith.constant 0 : index
    %c0_96 = arith.constant 0 : index
    %176 = vector.load %arg11[%c0_95, %c0_96] : memref<8x32xf32, #tpu.memory_space<vmem>>, vector<8x32xf32>
    tpu.vector_store %arg11[%c0_95, %c0_96], %175 {strides = array<i32>} : memref<8x32xf32, #tpu.memory_space<vmem>>, vector<8x32xf32>,
    %c0_97 = arith.constant 0 : index
    %c0_98 = arith.constant 0 : index
    %177 = vector.load %arg12[%c0_97, %c0_98] : memref<8x32xf32, #tpu.memory_space<vmem>>, vector<8x32xf32>
    tpu.vector_store %arg12[%c0_97, %c0_98], %173 {strides = array<i32>} : memref<8x32xf32, #tpu.memory_space<vmem>>, vector<8x32xf32>,
    %178 = arith.index_cast %c5_i32 : i32 to index
    %c0_99 = arith.constant 0 : index
    %c0_100 = arith.constant 0 : index
    %179 = vector.load %arg9[%178, %c0_99, %c0_100] : memref<8x8x32xf32, #tpu.memory_space<vmem>>, vector<1x8x32xf32>
    %180 = vector.shape_cast %179 : vector<1x8x32xf32> to vector<8x32xf32>
    %181 = vector.shape_cast %175 : vector<8x32xf32> to vector<1x8x32xf32>
    tpu.vector_store %arg9[%178, %c0_99, %c0_100], %181 {strides = array<i32>} : memref<8x8x32xf32, #tpu.memory_space<vmem>>, vector<1x8x32xf32>,
    %c6_i32 = arith.constant 6 : i32
    %c0_101 = arith.constant 0 : index
    %c0_102 = arith.constant 0 : index
    %182 = vector.load %arg11[%c0_101, %c0_102] : memref<8x32xf32, #tpu.memory_space<vmem>>, vector<8x32xf32>
    %c0_103 = arith.constant 0 : index
    %c0_104 = arith.constant 0 : index
    %183 = vector.load %arg12[%c0_103, %c0_104] : memref<8x32xf32, #tpu.memory_space<vmem>>, vector<8x32xf32>
    %184 = arith.index_cast %c6_i32 : i32 to index
    %c0_105 = arith.constant 0 : index
    %c0_106 = arith.constant 0 : index
    %185 = vector.load %arg10[%184, %c0_105, %c0_106] : memref<8x8x128xf32, #tpu.memory_space<vmem>>, vector<1x8x128xf32>
    %186 = vector.shape_cast %185 : vector<1x8x128xf32> to vector<8x128xf32>
    %cst_107 = arith.constant dense<0.000000e+00> : vector<8x128xf32>
    %187 = tpu.matmul %182, %1, %cst_107 {dimension_numbers = #tpu.dot_dimension_numbers<[1], [0], [0], [1], [0, 0, 1, 1], [], []>} : vector<8x32xf32>, vector<32x128xf32>, vector<8x128xf32> -> vector<8x128xf32>
    %188 = arith.addf %186, %187 : vector<8x128xf32>
    %189 = arith.negf %188 : vector<8x128xf32>
    %190 = math.exp %189 : vector<8x128xf32>
    %cst_108 = arith.constant 1.000000e+00 : f32
    %191 = vector.broadcast %cst_108 : f32 to vector<8x128xf32>
    %192 = arith.addf %191, %190 : vector<8x128xf32>
    %193 = arith.divf %191, %192 : vector<8x128xf32>
    %194 = math.tanh %188 : vector<8x128xf32>
    %195 = vector.extract_strided_slice %193 {offsets = [0, 0], sizes = [8, 32], strides = [1, 1]} : vector<8x128xf32> to vector<8x32xf32>
    %196 = vector.extract_strided_slice %193 {offsets = [0, 32], sizes = [8, 32], strides = [1, 1]} : vector<8x128xf32> to vector<8x32xf32>
    %197 = vector.extract_strided_slice %194 {offsets = [0, 64], sizes = [8, 32], strides = [1, 1]} : vector<8x128xf32> to vector<8x32xf32>
    %198 = vector.extract_strided_slice %193 {offsets = [0, 96], sizes = [8, 32], strides = [1, 1]} : vector<8x128xf32> to vector<8x32xf32>
    %199 = arith.mulf %196, %183 : vector<8x32xf32>
    %200 = arith.mulf %195, %197 : vector<8x32xf32>
    %201 = arith.addf %199, %200 : vector<8x32xf32>
    %202 = math.tanh %201 : vector<8x32xf32>
    %203 = arith.mulf %198, %202 : vector<8x32xf32>
    %c0_109 = arith.constant 0 : index
    %c0_110 = arith.constant 0 : index
    %204 = vector.load %arg11[%c0_109, %c0_110] : memref<8x32xf32, #tpu.memory_space<vmem>>, vector<8x32xf32>
    tpu.vector_store %arg11[%c0_109, %c0_110], %203 {strides = array<i32>} : memref<8x32xf32, #tpu.memory_space<vmem>>, vector<8x32xf32>,
    %c0_111 = arith.constant 0 : index
    %c0_112 = arith.constant 0 : index
    %205 = vector.load %arg12[%c0_111, %c0_112] : memref<8x32xf32, #tpu.memory_space<vmem>>, vector<8x32xf32>
    tpu.vector_store %arg12[%c0_111, %c0_112], %201 {strides = array<i32>} : memref<8x32xf32, #tpu.memory_space<vmem>>, vector<8x32xf32>,
    %206 = arith.index_cast %c6_i32 : i32 to index
    %c0_113 = arith.constant 0 : index
    %c0_114 = arith.constant 0 : index
    %207 = vector.load %arg9[%206, %c0_113, %c0_114] : memref<8x8x32xf32, #tpu.memory_space<vmem>>, vector<1x8x32xf32>
    %208 = vector.shape_cast %207 : vector<1x8x32xf32> to vector<8x32xf32>
    %209 = vector.shape_cast %203 : vector<8x32xf32> to vector<1x8x32xf32>
    tpu.vector_store %arg9[%206, %c0_113, %c0_114], %209 {strides = array<i32>} : memref<8x8x32xf32, #tpu.memory_space<vmem>>, vector<1x8x32xf32>,
    %c7_i32 = arith.constant 7 : i32
    %c0_115 = arith.constant 0 : index
    %c0_116 = arith.constant 0 : index
    %210 = vector.load %arg11[%c0_115, %c0_116] : memref<8x32xf32, #tpu.memory_space<vmem>>, vector<8x32xf32>
    %c0_117 = arith.constant 0 : index
    %c0_118 = arith.constant 0 : index
    %211 = vector.load %arg12[%c0_117, %c0_118] : memref<8x32xf32, #tpu.memory_space<vmem>>, vector<8x32xf32>
    %212 = arith.index_cast %c7_i32 : i32 to index
    %c0_119 = arith.constant 0 : index
    %c0_120 = arith.constant 0 : index
    %213 = vector.load %arg10[%212, %c0_119, %c0_120] : memref<8x8x128xf32, #tpu.memory_space<vmem>>, vector<1x8x128xf32>
    %214 = vector.shape_cast %213 : vector<1x8x128xf32> to vector<8x128xf32>
    %cst_121 = arith.constant dense<0.000000e+00> : vector<8x128xf32>
    %215 = tpu.matmul %210, %1, %cst_121 {dimension_numbers = #tpu.dot_dimension_numbers<[1], [0], [0], [1], [0, 0, 1, 1], [], []>} : vector<8x32xf32>, vector<32x128xf32>, vector<8x128xf32> -> vector<8x128xf32>
    %216 = arith.addf %214, %215 : vector<8x128xf32>
    %217 = arith.negf %216 : vector<8x128xf32>
    %218 = math.exp %217 : vector<8x128xf32>
    %cst_122 = arith.constant 1.000000e+00 : f32
    %219 = vector.broadcast %cst_122 : f32 to vector<8x128xf32>
    %220 = arith.addf %219, %218 : vector<8x128xf32>
    %221 = arith.divf %219, %220 : vector<8x128xf32>
    %222 = math.tanh %216 : vector<8x128xf32>
    %223 = vector.extract_strided_slice %221 {offsets = [0, 0], sizes = [8, 32], strides = [1, 1]} : vector<8x128xf32> to vector<8x32xf32>
    %224 = vector.extract_strided_slice %221 {offsets = [0, 32], sizes = [8, 32], strides = [1, 1]} : vector<8x128xf32> to vector<8x32xf32>
    %225 = vector.extract_strided_slice %222 {offsets = [0, 64], sizes = [8, 32], strides = [1, 1]} : vector<8x128xf32> to vector<8x32xf32>
    %226 = vector.extract_strided_slice %221 {offsets = [0, 96], sizes = [8, 32], strides = [1, 1]} : vector<8x128xf32> to vector<8x32xf32>
    %227 = arith.mulf %224, %211 : vector<8x32xf32>
    %228 = arith.mulf %223, %225 : vector<8x32xf32>
    %229 = arith.addf %227, %228 : vector<8x32xf32>
    %230 = math.tanh %229 : vector<8x32xf32>
    %231 = arith.mulf %226, %230 : vector<8x32xf32>
    %c0_123 = arith.constant 0 : index
    %c0_124 = arith.constant 0 : index
    %232 = vector.load %arg11[%c0_123, %c0_124] : memref<8x32xf32, #tpu.memory_space<vmem>>, vector<8x32xf32>
    tpu.vector_store %arg11[%c0_123, %c0_124], %231 {strides = array<i32>} : memref<8x32xf32, #tpu.memory_space<vmem>>, vector<8x32xf32>,
    %c0_125 = arith.constant 0 : index
    %c0_126 = arith.constant 0 : index
    %233 = vector.load %arg12[%c0_125, %c0_126] : memref<8x32xf32, #tpu.memory_space<vmem>>, vector<8x32xf32>
    tpu.vector_store %arg12[%c0_125, %c0_126], %229 {strides = array<i32>} : memref<8x32xf32, #tpu.memory_space<vmem>>, vector<8x32xf32>,
    %234 = arith.index_cast %c7_i32 : i32 to index
    %c0_127 = arith.constant 0 : index
    %c0_128 = arith.constant 0 : index
    %235 = vector.load %arg9[%234, %c0_127, %c0_128] : memref<8x8x32xf32, #tpu.memory_space<vmem>>, vector<1x8x32xf32>
    %236 = vector.shape_cast %235 : vector<1x8x32xf32> to vector<8x32xf32>
    %237 = vector.shape_cast %231 : vector<8x32xf32> to vector<1x8x32xf32>
    tpu.vector_store %arg9[%234, %c0_127, %c0_128], %237 {strides = array<i32>} : memref<8x8x32xf32, #tpu.memory_space<vmem>>, vector<1x8x32xf32>,
    %c8_i32 = arith.constant 8 : i32
    %c0_129 = arith.constant 0 : index
    %c0_130 = arith.constant 0 : index
    %238 = vector.load %arg11[%c0_129, %c0_130] : memref<8x32xf32, #tpu.memory_space<vmem>>, vector<8x32xf32>
    %c0_131 = arith.constant 0 : index
    %c0_132 = arith.constant 0 : index
    %c0_133 = arith.constant 0 : index
    %239 = vector.load %arg7[%c0_131, %c0_132, %c0_133] : memref<2x8x32xf32, #tpu.memory_space<vmem>>, vector<1x8x32xf32>
    %240 = vector.shape_cast %239 : vector<1x8x32xf32> to vector<8x32xf32>
    %241 = vector.shape_cast %238 : vector<8x32xf32> to vector<1x8x32xf32>
    tpu.vector_store %arg7[%c0_131, %c0_132, %c0_133], %241 {strides = array<i32>} : memref<2x8x32xf32, #tpu.memory_space<vmem>>, vector<1x8x32xf32>,
    %c0_134 = arith.constant 0 : index
    %c0_135 = arith.constant 0 : index
    %242 = vector.load %arg12[%c0_134, %c0_135] : memref<8x32xf32, #tpu.memory_space<vmem>>, vector<8x32xf32>
    %c0_136 = arith.constant 0 : index
    %c0_137 = arith.constant 0 : index
    %c0_138 = arith.constant 0 : index
    %243 = vector.load %arg8[%c0_136, %c0_137, %c0_138] : memref<2x8x32xf32, #tpu.memory_space<vmem>>, vector<1x8x32xf32>
    %244 = vector.shape_cast %243 : vector<1x8x32xf32> to vector<8x32xf32>
    %245 = vector.shape_cast %242 : vector<8x32xf32> to vector<1x8x32xf32>
    tpu.vector_store %arg8[%c0_136, %c0_137, %c0_138], %245 {strides = array<i32>} : memref<2x8x32xf32, #tpu.memory_space<vmem>>, vector<1x8x32xf32>,
    %c0_139 = arith.constant 0 : index
    %c0_140 = arith.constant 0 : index
    %246 = vector.load %arg4[%c0_139, %c0_140] : memref<32x128xf32, #tpu.memory_space<vmem>>, vector<32x128xf32>
    %c0_141 = arith.constant 0 : index
    %c0_142 = arith.constant 0 : index
    %247 = vector.load %arg5[%c0_141, %c0_142] : memref<32x128xf32, #tpu.memory_space<vmem>>, vector<32x128xf32>
    %c0_143 = arith.constant 0 : index
    %c0_144 = arith.constant 0 : index
    %248 = vector.load %arg6[%c0_143, %c0_144] : memref<1x128xf32, #tpu.memory_space<vmem>>, vector<1x128xf32>
    %c0_145 = arith.constant 0 : index
    %c0_146 = arith.constant 0 : index
    %c0_147 = arith.constant 0 : index
    %249 = vector.load %arg9[%c0_145, %c0_146, %c0_147] : memref<8x8x32xf32, #tpu.memory_space<vmem>>, vector<8x8x32xf32>
    %250 = vector.shape_cast %249 : vector<8x8x32xf32> to vector<64x32xf32>
    %cst_148 = arith.constant dense<0.000000e+00> : vector<64x128xf32>
    %251 = tpu.matmul %250, %246, %cst_148 {dimension_numbers = #tpu.dot_dimension_numbers<[1], [0], [0], [1], [0, 0, 1, 1], [], []>} : vector<64x32xf32>, vector<32x128xf32>, vector<64x128xf32> -> vector<64x128xf32>
    %252 = vector.broadcast %248 : vector<1x128xf32> to vector<64x128xf32>
    %253 = arith.addf %251, %252 : vector<64x128xf32>
    %254 = vector.shape_cast %253 : vector<64x128xf32> to vector<8x8x128xf32>
    %c0_149 = arith.constant 0 : index
    %c0_150 = arith.constant 0 : index
    %c0_151 = arith.constant 0 : index
    %255 = vector.load %arg10[%c0_149, %c0_150, %c0_151] : memref<8x8x128xf32, #tpu.memory_space<vmem>>, vector<8x8x128xf32>
    tpu.vector_store %arg10[%c0_149, %c0_150, %c0_151], %254 {strides = array<i32>} : memref<8x8x128xf32, #tpu.memory_space<vmem>>, vector<8x8x128xf32>,
    %cst_152 = arith.constant 0.000000e+00 : f32
    %256 = vector.broadcast %cst_152 : f32 to vector<8x32xf32>
    %c0_153 = arith.constant 0 : index
    %c0_154 = arith.constant 0 : index
    %257 = vector.load %arg11[%c0_153, %c0_154] : memref<8x32xf32, #tpu.memory_space<vmem>>, vector<8x32xf32>
    tpu.vector_store %arg11[%c0_153, %c0_154], %256 {strides = array<i32>} : memref<8x32xf32, #tpu.memory_space<vmem>>, vector<8x32xf32>,
    %cst_155 = arith.constant 0.000000e+00 : f32
    %258 = vector.broadcast %cst_155 : f32 to vector<8x32xf32>
    %c0_156 = arith.constant 0 : index
    %c0_157 = arith.constant 0 : index
    %259 = vector.load %arg12[%c0_156, %c0_157] : memref<8x32xf32, #tpu.memory_space<vmem>>, vector<8x32xf32>
    tpu.vector_store %arg12[%c0_156, %c0_157], %258 {strides = array<i32>} : memref<8x32xf32, #tpu.memory_space<vmem>>, vector<8x32xf32>,
    %c0_i32_158 = arith.constant 0 : i32
    %c0_159 = arith.constant 0 : index
    %c0_160 = arith.constant 0 : index
    %260 = vector.load %arg11[%c0_159, %c0_160] : memref<8x32xf32, #tpu.memory_space<vmem>>, vector<8x32xf32>
    %c0_161 = arith.constant 0 : index
    %c0_162 = arith.constant 0 : index
    %261 = vector.load %arg12[%c0_161, %c0_162] : memref<8x32xf32, #tpu.memory_space<vmem>>, vector<8x32xf32>
    %262 = arith.index_cast %c0_i32_158 : i32 to index
    %c0_163 = arith.constant 0 : index
    %c0_164 = arith.constant 0 : index
    %263 = vector.load %arg10[%262, %c0_163, %c0_164] : memref<8x8x128xf32, #tpu.memory_space<vmem>>, vector<1x8x128xf32>
    %264 = vector.shape_cast %263 : vector<1x8x128xf32> to vector<8x128xf32>
    %cst_165 = arith.constant dense<0.000000e+00> : vector<8x128xf32>
    %265 = tpu.matmul %260, %247, %cst_165 {dimension_numbers = #tpu.dot_dimension_numbers<[1], [0], [0], [1], [0, 0, 1, 1], [], []>} : vector<8x32xf32>, vector<32x128xf32>, vector<8x128xf32> -> vector<8x128xf32>
    %266 = arith.addf %264, %265 : vector<8x128xf32>
    %267 = arith.negf %266 : vector<8x128xf32>
    %268 = math.exp %267 : vector<8x128xf32>
    %cst_166 = arith.constant 1.000000e+00 : f32
    %269 = vector.broadcast %cst_166 : f32 to vector<8x128xf32>
    %270 = arith.addf %269, %268 : vector<8x128xf32>
    %271 = arith.divf %269, %270 : vector<8x128xf32>
    %272 = math.tanh %266 : vector<8x128xf32>
    %273 = vector.extract_strided_slice %271 {offsets = [0, 0], sizes = [8, 32], strides = [1, 1]} : vector<8x128xf32> to vector<8x32xf32>
    %274 = vector.extract_strided_slice %271 {offsets = [0, 32], sizes = [8, 32], strides = [1, 1]} : vector<8x128xf32> to vector<8x32xf32>
    %275 = vector.extract_strided_slice %272 {offsets = [0, 64], sizes = [8, 32], strides = [1, 1]} : vector<8x128xf32> to vector<8x32xf32>
    %276 = vector.extract_strided_slice %271 {offsets = [0, 96], sizes = [8, 32], strides = [1, 1]} : vector<8x128xf32> to vector<8x32xf32>
    %277 = arith.mulf %274, %261 : vector<8x32xf32>
    %278 = arith.mulf %273, %275 : vector<8x32xf32>
    %279 = arith.addf %277, %278 : vector<8x32xf32>
    %280 = math.tanh %279 : vector<8x32xf32>
    %281 = arith.mulf %276, %280 : vector<8x32xf32>
    %c0_167 = arith.constant 0 : index
    %c0_168 = arith.constant 0 : index
    %282 = vector.load %arg11[%c0_167, %c0_168] : memref<8x32xf32, #tpu.memory_space<vmem>>, vector<8x32xf32>
    tpu.vector_store %arg11[%c0_167, %c0_168], %281 {strides = array<i32>} : memref<8x32xf32, #tpu.memory_space<vmem>>, vector<8x32xf32>,
    %c0_169 = arith.constant 0 : index
    %c0_170 = arith.constant 0 : index
    %283 = vector.load %arg12[%c0_169, %c0_170] : memref<8x32xf32, #tpu.memory_space<vmem>>, vector<8x32xf32>
    tpu.vector_store %arg12[%c0_169, %c0_170], %279 {strides = array<i32>} : memref<8x32xf32, #tpu.memory_space<vmem>>, vector<8x32xf32>,
    %c1_i32_171 = arith.constant 1 : i32
    %c0_172 = arith.constant 0 : index
    %c0_173 = arith.constant 0 : index
    %284 = vector.load %arg11[%c0_172, %c0_173] : memref<8x32xf32, #tpu.memory_space<vmem>>, vector<8x32xf32>
    %c0_174 = arith.constant 0 : index
    %c0_175 = arith.constant 0 : index
    %285 = vector.load %arg12[%c0_174, %c0_175] : memref<8x32xf32, #tpu.memory_space<vmem>>, vector<8x32xf32>
    %286 = arith.index_cast %c1_i32_171 : i32 to index
    %c0_176 = arith.constant 0 : index
    %c0_177 = arith.constant 0 : index
    %287 = vector.load %arg10[%286, %c0_176, %c0_177] : memref<8x8x128xf32, #tpu.memory_space<vmem>>, vector<1x8x128xf32>
    %288 = vector.shape_cast %287 : vector<1x8x128xf32> to vector<8x128xf32>
    %cst_178 = arith.constant dense<0.000000e+00> : vector<8x128xf32>
    %289 = tpu.matmul %284, %247, %cst_178 {dimension_numbers = #tpu.dot_dimension_numbers<[1], [0], [0], [1], [0, 0, 1, 1], [], []>} : vector<8x32xf32>, vector<32x128xf32>, vector<8x128xf32> -> vector<8x128xf32>
    %290 = arith.addf %288, %289 : vector<8x128xf32>
    %291 = arith.negf %290 : vector<8x128xf32>
    %292 = math.exp %291 : vector<8x128xf32>
    %cst_179 = arith.constant 1.000000e+00 : f32
    %293 = vector.broadcast %cst_179 : f32 to vector<8x128xf32>
    %294 = arith.addf %293, %292 : vector<8x128xf32>
    %295 = arith.divf %293, %294 : vector<8x128xf32>
    %296 = math.tanh %290 : vector<8x128xf32>
    %297 = vector.extract_strided_slice %295 {offsets = [0, 0], sizes = [8, 32], strides = [1, 1]} : vector<8x128xf32> to vector<8x32xf32>
    %298 = vector.extract_strided_slice %295 {offsets = [0, 32], sizes = [8, 32], strides = [1, 1]} : vector<8x128xf32> to vector<8x32xf32>
    %299 = vector.extract_strided_slice %296 {offsets = [0, 64], sizes = [8, 32], strides = [1, 1]} : vector<8x128xf32> to vector<8x32xf32>
    %300 = vector.extract_strided_slice %295 {offsets = [0, 96], sizes = [8, 32], strides = [1, 1]} : vector<8x128xf32> to vector<8x32xf32>
    %301 = arith.mulf %298, %285 : vector<8x32xf32>
    %302 = arith.mulf %297, %299 : vector<8x32xf32>
    %303 = arith.addf %301, %302 : vector<8x32xf32>
    %304 = math.tanh %303 : vector<8x32xf32>
    %305 = arith.mulf %300, %304 : vector<8x32xf32>
    %c0_180 = arith.constant 0 : index
    %c0_181 = arith.constant 0 : index
    %306 = vector.load %arg11[%c0_180, %c0_181] : memref<8x32xf32, #tpu.memory_space<vmem>>, vector<8x32xf32>
    tpu.vector_store %arg11[%c0_180, %c0_181], %305 {strides = array<i32>} : memref<8x32xf32, #tpu.memory_space<vmem>>, vector<8x32xf32>,
    %c0_182 = arith.constant 0 : index
    %c0_183 = arith.constant 0 : index
    %307 = vector.load %arg12[%c0_182, %c0_183] : memref<8x32xf32, #tpu.memory_space<vmem>>, vector<8x32xf32>
    tpu.vector_store %arg12[%c0_182, %c0_183], %303 {strides = array<i32>} : memref<8x32xf32, #tpu.memory_space<vmem>>, vector<8x32xf32>,
    %c2_i32_184 = arith.constant 2 : i32
    %c0_185 = arith.constant 0 : index
    %c0_186 = arith.constant 0 : index
    %308 = vector.load %arg11[%c0_185, %c0_186] : memref<8x32xf32, #tpu.memory_space<vmem>>, vector<8x32xf32>
    %c0_187 = arith.constant 0 : index
    %c0_188 = arith.constant 0 : index
    %309 = vector.load %arg12[%c0_187, %c0_188] : memref<8x32xf32, #tpu.memory_space<vmem>>, vector<8x32xf32>
    %310 = arith.index_cast %c2_i32_184 : i32 to index
    %c0_189 = arith.constant 0 : index
    %c0_190 = arith.constant 0 : index
    %311 = vector.load %arg10[%310, %c0_189, %c0_190] : memref<8x8x128xf32, #tpu.memory_space<vmem>>, vector<1x8x128xf32>
    %312 = vector.shape_cast %311 : vector<1x8x128xf32> to vector<8x128xf32>
    %cst_191 = arith.constant dense<0.000000e+00> : vector<8x128xf32>
    %313 = tpu.matmul %308, %247, %cst_191 {dimension_numbers = #tpu.dot_dimension_numbers<[1], [0], [0], [1], [0, 0, 1, 1], [], []>} : vector<8x32xf32>, vector<32x128xf32>, vector<8x128xf32> -> vector<8x128xf32>
    %314 = arith.addf %312, %313 : vector<8x128xf32>
    %315 = arith.negf %314 : vector<8x128xf32>
    %316 = math.exp %315 : vector<8x128xf32>
    %cst_192 = arith.constant 1.000000e+00 : f32
    %317 = vector.broadcast %cst_192 : f32 to vector<8x128xf32>
    %318 = arith.addf %317, %316 : vector<8x128xf32>
    %319 = arith.divf %317, %318 : vector<8x128xf32>
    %320 = math.tanh %314 : vector<8x128xf32>
    %321 = vector.extract_strided_slice %319 {offsets = [0, 0], sizes = [8, 32], strides = [1, 1]} : vector<8x128xf32> to vector<8x32xf32>
    %322 = vector.extract_strided_slice %319 {offsets = [0, 32], sizes = [8, 32], strides = [1, 1]} : vector<8x128xf32> to vector<8x32xf32>
    %323 = vector.extract_strided_slice %320 {offsets = [0, 64], sizes = [8, 32], strides = [1, 1]} : vector<8x128xf32> to vector<8x32xf32>
    %324 = vector.extract_strided_slice %319 {offsets = [0, 96], sizes = [8, 32], strides = [1, 1]} : vector<8x128xf32> to vector<8x32xf32>
    %325 = arith.mulf %322, %309 : vector<8x32xf32>
    %326 = arith.mulf %321, %323 : vector<8x32xf32>
    %327 = arith.addf %325, %326 : vector<8x32xf32>
    %328 = math.tanh %327 : vector<8x32xf32>
    %329 = arith.mulf %324, %328 : vector<8x32xf32>
    %c0_193 = arith.constant 0 : index
    %c0_194 = arith.constant 0 : index
    %330 = vector.load %arg11[%c0_193, %c0_194] : memref<8x32xf32, #tpu.memory_space<vmem>>, vector<8x32xf32>
    tpu.vector_store %arg11[%c0_193, %c0_194], %329 {strides = array<i32>} : memref<8x32xf32, #tpu.memory_space<vmem>>, vector<8x32xf32>,
    %c0_195 = arith.constant 0 : index
    %c0_196 = arith.constant 0 : index
    %331 = vector.load %arg12[%c0_195, %c0_196] : memref<8x32xf32, #tpu.memory_space<vmem>>, vector<8x32xf32>
    tpu.vector_store %arg12[%c0_195, %c0_196], %327 {strides = array<i32>} : memref<8x32xf32, #tpu.memory_space<vmem>>, vector<8x32xf32>,
    %c3_i32_197 = arith.constant 3 : i32
    %c0_198 = arith.constant 0 : index
    %c0_199 = arith.constant 0 : index
    %332 = vector.load %arg11[%c0_198, %c0_199] : memref<8x32xf32, #tpu.memory_space<vmem>>, vector<8x32xf32>
    %c0_200 = arith.constant 0 : index
    %c0_201 = arith.constant 0 : index
    %333 = vector.load %arg12[%c0_200, %c0_201] : memref<8x32xf32, #tpu.memory_space<vmem>>, vector<8x32xf32>
    %334 = arith.index_cast %c3_i32_197 : i32 to index
    %c0_202 = arith.constant 0 : index
    %c0_203 = arith.constant 0 : index
    %335 = vector.load %arg10[%334, %c0_202, %c0_203] : memref<8x8x128xf32, #tpu.memory_space<vmem>>, vector<1x8x128xf32>
    %336 = vector.shape_cast %335 : vector<1x8x128xf32> to vector<8x128xf32>
    %cst_204 = arith.constant dense<0.000000e+00> : vector<8x128xf32>
    %337 = tpu.matmul %332, %247, %cst_204 {dimension_numbers = #tpu.dot_dimension_numbers<[1], [0], [0], [1], [0, 0, 1, 1], [], []>} : vector<8x32xf32>, vector<32x128xf32>, vector<8x128xf32> -> vector<8x128xf32>
    %338 = arith.addf %336, %337 : vector<8x128xf32>
    %339 = arith.negf %338 : vector<8x128xf32>
    %340 = math.exp %339 : vector<8x128xf32>
    %cst_205 = arith.constant 1.000000e+00 : f32
    %341 = vector.broadcast %cst_205 : f32 to vector<8x128xf32>
    %342 = arith.addf %341, %340 : vector<8x128xf32>
    %343 = arith.divf %341, %342 : vector<8x128xf32>
    %344 = math.tanh %338 : vector<8x128xf32>
    %345 = vector.extract_strided_slice %343 {offsets = [0, 0], sizes = [8, 32], strides = [1, 1]} : vector<8x128xf32> to vector<8x32xf32>
    %346 = vector.extract_strided_slice %343 {offsets = [0, 32], sizes = [8, 32], strides = [1, 1]} : vector<8x128xf32> to vector<8x32xf32>
    %347 = vector.extract_strided_slice %344 {offsets = [0, 64], sizes = [8, 32], strides = [1, 1]} : vector<8x128xf32> to vector<8x32xf32>
    %348 = vector.extract_strided_slice %343 {offsets = [0, 96], sizes = [8, 32], strides = [1, 1]} : vector<8x128xf32> to vector<8x32xf32>
    %349 = arith.mulf %346, %333 : vector<8x32xf32>
    %350 = arith.mulf %345, %347 : vector<8x32xf32>
    %351 = arith.addf %349, %350 : vector<8x32xf32>
    %352 = math.tanh %351 : vector<8x32xf32>
    %353 = arith.mulf %348, %352 : vector<8x32xf32>
    %c0_206 = arith.constant 0 : index
    %c0_207 = arith.constant 0 : index
    %354 = vector.load %arg11[%c0_206, %c0_207] : memref<8x32xf32, #tpu.memory_space<vmem>>, vector<8x32xf32>
    tpu.vector_store %arg11[%c0_206, %c0_207], %353 {strides = array<i32>} : memref<8x32xf32, #tpu.memory_space<vmem>>, vector<8x32xf32>,
    %c0_208 = arith.constant 0 : index
    %c0_209 = arith.constant 0 : index
    %355 = vector.load %arg12[%c0_208, %c0_209] : memref<8x32xf32, #tpu.memory_space<vmem>>, vector<8x32xf32>
    tpu.vector_store %arg12[%c0_208, %c0_209], %351 {strides = array<i32>} : memref<8x32xf32, #tpu.memory_space<vmem>>, vector<8x32xf32>,
    %c4_i32_210 = arith.constant 4 : i32
    %c0_211 = arith.constant 0 : index
    %c0_212 = arith.constant 0 : index
    %356 = vector.load %arg11[%c0_211, %c0_212] : memref<8x32xf32, #tpu.memory_space<vmem>>, vector<8x32xf32>
    %c0_213 = arith.constant 0 : index
    %c0_214 = arith.constant 0 : index
    %357 = vector.load %arg12[%c0_213, %c0_214] : memref<8x32xf32, #tpu.memory_space<vmem>>, vector<8x32xf32>
    %358 = arith.index_cast %c4_i32_210 : i32 to index
    %c0_215 = arith.constant 0 : index
    %c0_216 = arith.constant 0 : index
    %359 = vector.load %arg10[%358, %c0_215, %c0_216] : memref<8x8x128xf32, #tpu.memory_space<vmem>>, vector<1x8x128xf32>
    %360 = vector.shape_cast %359 : vector<1x8x128xf32> to vector<8x128xf32>
    %cst_217 = arith.constant dense<0.000000e+00> : vector<8x128xf32>
    %361 = tpu.matmul %356, %247, %cst_217 {dimension_numbers = #tpu.dot_dimension_numbers<[1], [0], [0], [1], [0, 0, 1, 1], [], []>} : vector<8x32xf32>, vector<32x128xf32>, vector<8x128xf32> -> vector<8x128xf32>
    %362 = arith.addf %360, %361 : vector<8x128xf32>
    %363 = arith.negf %362 : vector<8x128xf32>
    %364 = math.exp %363 : vector<8x128xf32>
    %cst_218 = arith.constant 1.000000e+00 : f32
    %365 = vector.broadcast %cst_218 : f32 to vector<8x128xf32>
    %366 = arith.addf %365, %364 : vector<8x128xf32>
    %367 = arith.divf %365, %366 : vector<8x128xf32>
    %368 = math.tanh %362 : vector<8x128xf32>
    %369 = vector.extract_strided_slice %367 {offsets = [0, 0], sizes = [8, 32], strides = [1, 1]} : vector<8x128xf32> to vector<8x32xf32>
    %370 = vector.extract_strided_slice %367 {offsets = [0, 32], sizes = [8, 32], strides = [1, 1]} : vector<8x128xf32> to vector<8x32xf32>
    %371 = vector.extract_strided_slice %368 {offsets = [0, 64], sizes = [8, 32], strides = [1, 1]} : vector<8x128xf32> to vector<8x32xf32>
    %372 = vector.extract_strided_slice %367 {offsets = [0, 96], sizes = [8, 32], strides = [1, 1]} : vector<8x128xf32> to vector<8x32xf32>
    %373 = arith.mulf %370, %357 : vector<8x32xf32>
    %374 = arith.mulf %369, %371 : vector<8x32xf32>
    %375 = arith.addf %373, %374 : vector<8x32xf32>
    %376 = math.tanh %375 : vector<8x32xf32>
    %377 = arith.mulf %372, %376 : vector<8x32xf32>
    %c0_219 = arith.constant 0 : index
    %c0_220 = arith.constant 0 : index
    %378 = vector.load %arg11[%c0_219, %c0_220] : memref<8x32xf32, #tpu.memory_space<vmem>>, vector<8x32xf32>
    tpu.vector_store %arg11[%c0_219, %c0_220], %377 {strides = array<i32>} : memref<8x32xf32, #tpu.memory_space<vmem>>, vector<8x32xf32>,
    %c0_221 = arith.constant 0 : index
    %c0_222 = arith.constant 0 : index
    %379 = vector.load %arg12[%c0_221, %c0_222] : memref<8x32xf32, #tpu.memory_space<vmem>>, vector<8x32xf32>
    tpu.vector_store %arg12[%c0_221, %c0_222], %375 {strides = array<i32>} : memref<8x32xf32, #tpu.memory_space<vmem>>, vector<8x32xf32>,
    %c5_i32_223 = arith.constant 5 : i32
    %c0_224 = arith.constant 0 : index
    %c0_225 = arith.constant 0 : index
    %380 = vector.load %arg11[%c0_224, %c0_225] : memref<8x32xf32, #tpu.memory_space<vmem>>, vector<8x32xf32>
    %c0_226 = arith.constant 0 : index
    %c0_227 = arith.constant 0 : index
    %381 = vector.load %arg12[%c0_226, %c0_227] : memref<8x32xf32, #tpu.memory_space<vmem>>, vector<8x32xf32>
    %382 = arith.index_cast %c5_i32_223 : i32 to index
    %c0_228 = arith.constant 0 : index
    %c0_229 = arith.constant 0 : index
    %383 = vector.load %arg10[%382, %c0_228, %c0_229] : memref<8x8x128xf32, #tpu.memory_space<vmem>>, vector<1x8x128xf32>
    %384 = vector.shape_cast %383 : vector<1x8x128xf32> to vector<8x128xf32>
    %cst_230 = arith.constant dense<0.000000e+00> : vector<8x128xf32>
    %385 = tpu.matmul %380, %247, %cst_230 {dimension_numbers = #tpu.dot_dimension_numbers<[1], [0], [0], [1], [0, 0, 1, 1], [], []>} : vector<8x32xf32>, vector<32x128xf32>, vector<8x128xf32> -> vector<8x128xf32>
    %386 = arith.addf %384, %385 : vector<8x128xf32>
    %387 = arith.negf %386 : vector<8x128xf32>
    %388 = math.exp %387 : vector<8x128xf32>
    %cst_231 = arith.constant 1.000000e+00 : f32
    %389 = vector.broadcast %cst_231 : f32 to vector<8x128xf32>
    %390 = arith.addf %389, %388 : vector<8x128xf32>
    %391 = arith.divf %389, %390 : vector<8x128xf32>
    %392 = math.tanh %386 : vector<8x128xf32>
    %393 = vector.extract_strided_slice %391 {offsets = [0, 0], sizes = [8, 32], strides = [1, 1]} : vector<8x128xf32> to vector<8x32xf32>
    %394 = vector.extract_strided_slice %391 {offsets = [0, 32], sizes = [8, 32], strides = [1, 1]} : vector<8x128xf32> to vector<8x32xf32>
    %395 = vector.extract_strided_slice %392 {offsets = [0, 64], sizes = [8, 32], strides = [1, 1]} : vector<8x128xf32> to vector<8x32xf32>
    %396 = vector.extract_strided_slice %391 {offsets = [0, 96], sizes = [8, 32], strides = [1, 1]} : vector<8x128xf32> to vector<8x32xf32>
    %397 = arith.mulf %394, %381 : vector<8x32xf32>
    %398 = arith.mulf %393, %395 : vector<8x32xf32>
    %399 = arith.addf %397, %398 : vector<8x32xf32>
    %400 = math.tanh %399 : vector<8x32xf32>
    %401 = arith.mulf %396, %400 : vector<8x32xf32>
    %c0_232 = arith.constant 0 : index
    %c0_233 = arith.constant 0 : index
    %402 = vector.load %arg11[%c0_232, %c0_233] : memref<8x32xf32, #tpu.memory_space<vmem>>, vector<8x32xf32>
    tpu.vector_store %arg11[%c0_232, %c0_233], %401 {strides = array<i32>} : memref<8x32xf32, #tpu.memory_space<vmem>>, vector<8x32xf32>,
    %c0_234 = arith.constant 0 : index
    %c0_235 = arith.constant 0 : index
    %403 = vector.load %arg12[%c0_234, %c0_235] : memref<8x32xf32, #tpu.memory_space<vmem>>, vector<8x32xf32>
    tpu.vector_store %arg12[%c0_234, %c0_235], %399 {strides = array<i32>} : memref<8x32xf32, #tpu.memory_space<vmem>>, vector<8x32xf32>,
    %c6_i32_236 = arith.constant 6 : i32
    %c0_237 = arith.constant 0 : index
    %c0_238 = arith.constant 0 : index
    %404 = vector.load %arg11[%c0_237, %c0_238] : memref<8x32xf32, #tpu.memory_space<vmem>>, vector<8x32xf32>
    %c0_239 = arith.constant 0 : index
    %c0_240 = arith.constant 0 : index
    %405 = vector.load %arg12[%c0_239, %c0_240] : memref<8x32xf32, #tpu.memory_space<vmem>>, vector<8x32xf32>
    %406 = arith.index_cast %c6_i32_236 : i32 to index
    %c0_241 = arith.constant 0 : index
    %c0_242 = arith.constant 0 : index
    %407 = vector.load %arg10[%406, %c0_241, %c0_242] : memref<8x8x128xf32, #tpu.memory_space<vmem>>, vector<1x8x128xf32>
    %408 = vector.shape_cast %407 : vector<1x8x128xf32> to vector<8x128xf32>
    %cst_243 = arith.constant dense<0.000000e+00> : vector<8x128xf32>
    %409 = tpu.matmul %404, %247, %cst_243 {dimension_numbers = #tpu.dot_dimension_numbers<[1], [0], [0], [1], [0, 0, 1, 1], [], []>} : vector<8x32xf32>, vector<32x128xf32>, vector<8x128xf32> -> vector<8x128xf32>
    %410 = arith.addf %408, %409 : vector<8x128xf32>
    %411 = arith.negf %410 : vector<8x128xf32>
    %412 = math.exp %411 : vector<8x128xf32>
    %cst_244 = arith.constant 1.000000e+00 : f32
    %413 = vector.broadcast %cst_244 : f32 to vector<8x128xf32>
    %414 = arith.addf %413, %412 : vector<8x128xf32>
    %415 = arith.divf %413, %414 : vector<8x128xf32>
    %416 = math.tanh %410 : vector<8x128xf32>
    %417 = vector.extract_strided_slice %415 {offsets = [0, 0], sizes = [8, 32], strides = [1, 1]} : vector<8x128xf32> to vector<8x32xf32>
    %418 = vector.extract_strided_slice %415 {offsets = [0, 32], sizes = [8, 32], strides = [1, 1]} : vector<8x128xf32> to vector<8x32xf32>
    %419 = vector.extract_strided_slice %416 {offsets = [0, 64], sizes = [8, 32], strides = [1, 1]} : vector<8x128xf32> to vector<8x32xf32>
    %420 = vector.extract_strided_slice %415 {offsets = [0, 96], sizes = [8, 32], strides = [1, 1]} : vector<8x128xf32> to vector<8x32xf32>
    %421 = arith.mulf %418, %405 : vector<8x32xf32>
    %422 = arith.mulf %417, %419 : vector<8x32xf32>
    %423 = arith.addf %421, %422 : vector<8x32xf32>
    %424 = math.tanh %423 : vector<8x32xf32>
    %425 = arith.mulf %420, %424 : vector<8x32xf32>
    %c0_245 = arith.constant 0 : index
    %c0_246 = arith.constant 0 : index
    %426 = vector.load %arg11[%c0_245, %c0_246] : memref<8x32xf32, #tpu.memory_space<vmem>>, vector<8x32xf32>
    tpu.vector_store %arg11[%c0_245, %c0_246], %425 {strides = array<i32>} : memref<8x32xf32, #tpu.memory_space<vmem>>, vector<8x32xf32>,
    %c0_247 = arith.constant 0 : index
    %c0_248 = arith.constant 0 : index
    %427 = vector.load %arg12[%c0_247, %c0_248] : memref<8x32xf32, #tpu.memory_space<vmem>>, vector<8x32xf32>
    tpu.vector_store %arg12[%c0_247, %c0_248], %423 {strides = array<i32>} : memref<8x32xf32, #tpu.memory_space<vmem>>, vector<8x32xf32>,
    %c7_i32_249 = arith.constant 7 : i32
    %c0_250 = arith.constant 0 : index
    %c0_251 = arith.constant 0 : index
    %428 = vector.load %arg11[%c0_250, %c0_251] : memref<8x32xf32, #tpu.memory_space<vmem>>, vector<8x32xf32>
    %c0_252 = arith.constant 0 : index
    %c0_253 = arith.constant 0 : index
    %429 = vector.load %arg12[%c0_252, %c0_253] : memref<8x32xf32, #tpu.memory_space<vmem>>, vector<8x32xf32>
    %430 = arith.index_cast %c7_i32_249 : i32 to index
    %c0_254 = arith.constant 0 : index
    %c0_255 = arith.constant 0 : index
    %431 = vector.load %arg10[%430, %c0_254, %c0_255] : memref<8x8x128xf32, #tpu.memory_space<vmem>>, vector<1x8x128xf32>
    %432 = vector.shape_cast %431 : vector<1x8x128xf32> to vector<8x128xf32>
    %cst_256 = arith.constant dense<0.000000e+00> : vector<8x128xf32>
    %433 = tpu.matmul %428, %247, %cst_256 {dimension_numbers = #tpu.dot_dimension_numbers<[1], [0], [0], [1], [0, 0, 1, 1], [], []>} : vector<8x32xf32>, vector<32x128xf32>, vector<8x128xf32> -> vector<8x128xf32>
    %434 = arith.addf %432, %433 : vector<8x128xf32>
    %435 = arith.negf %434 : vector<8x128xf32>
    %436 = math.exp %435 : vector<8x128xf32>
    %cst_257 = arith.constant 1.000000e+00 : f32
    %437 = vector.broadcast %cst_257 : f32 to vector<8x128xf32>
    %438 = arith.addf %437, %436 : vector<8x128xf32>
    %439 = arith.divf %437, %438 : vector<8x128xf32>
    %440 = math.tanh %434 : vector<8x128xf32>
    %441 = vector.extract_strided_slice %439 {offsets = [0, 0], sizes = [8, 32], strides = [1, 1]} : vector<8x128xf32> to vector<8x32xf32>
    %442 = vector.extract_strided_slice %439 {offsets = [0, 32], sizes = [8, 32], strides = [1, 1]} : vector<8x128xf32> to vector<8x32xf32>
    %443 = vector.extract_strided_slice %440 {offsets = [0, 64], sizes = [8, 32], strides = [1, 1]} : vector<8x128xf32> to vector<8x32xf32>
    %444 = vector.extract_strided_slice %439 {offsets = [0, 96], sizes = [8, 32], strides = [1, 1]} : vector<8x128xf32> to vector<8x32xf32>
    %445 = arith.mulf %442, %429 : vector<8x32xf32>
    %446 = arith.mulf %441, %443 : vector<8x32xf32>
    %447 = arith.addf %445, %446 : vector<8x32xf32>
    %448 = math.tanh %447 : vector<8x32xf32>
    %449 = arith.mulf %444, %448 : vector<8x32xf32>
    %c0_258 = arith.constant 0 : index
    %c0_259 = arith.constant 0 : index
    %450 = vector.load %arg11[%c0_258, %c0_259] : memref<8x32xf32, #tpu.memory_space<vmem>>, vector<8x32xf32>
    tpu.vector_store %arg11[%c0_258, %c0_259], %449 {strides = array<i32>} : memref<8x32xf32, #tpu.memory_space<vmem>>, vector<8x32xf32>,
    %c0_260 = arith.constant 0 : index
    %c0_261 = arith.constant 0 : index
    %451 = vector.load %arg12[%c0_260, %c0_261] : memref<8x32xf32, #tpu.memory_space<vmem>>, vector<8x32xf32>
    tpu.vector_store %arg12[%c0_260, %c0_261], %447 {strides = array<i32>} : memref<8x32xf32, #tpu.memory_space<vmem>>, vector<8x32xf32>,
    %c8_i32_262 = arith.constant 8 : i32
    %c0_263 = arith.constant 0 : index
    %c0_264 = arith.constant 0 : index
    %452 = vector.load %arg11[%c0_263, %c0_264] : memref<8x32xf32, #tpu.memory_space<vmem>>, vector<8x32xf32>
    %c1 = arith.constant 1 : index
    %c0_265 = arith.constant 0 : index
    %c0_266 = arith.constant 0 : index
    %453 = vector.load %arg7[%c1, %c0_265, %c0_266] : memref<2x8x32xf32, #tpu.memory_space<vmem>>, vector<1x8x32xf32>
    %454 = vector.shape_cast %453 : vector<1x8x32xf32> to vector<8x32xf32>
    %455 = vector.shape_cast %452 : vector<8x32xf32> to vector<1x8x32xf32>
    tpu.vector_store %arg7[%c1, %c0_265, %c0_266], %455 {strides = array<i32>} : memref<2x8x32xf32, #tpu.memory_space<vmem>>, vector<1x8x32xf32>,
    %c0_267 = arith.constant 0 : index
    %c0_268 = arith.constant 0 : index
    %456 = vector.load %arg12[%c0_267, %c0_268] : memref<8x32xf32, #tpu.memory_space<vmem>>, vector<8x32xf32>
    %c1_269 = arith.constant 1 : index
    %c0_270 = arith.constant 0 : index
    %c0_271 = arith.constant 0 : index
    %457 = vector.load %arg8[%c1_269, %c0_270, %c0_271] : memref<2x8x32xf32, #tpu.memory_space<vmem>>, vector<1x8x32xf32>
    %458 = vector.shape_cast %457 : vector<1x8x32xf32> to vector<8x32xf32>
    %459 = vector.shape_cast %456 : vector<8x32xf32> to vector<1x8x32xf32>
    tpu.vector_store %arg8[%c1_269, %c0_270, %c0_271], %459 {strides = array<i32>} : memref<2x8x32xf32, #tpu.memory_space<vmem>>, vector<1x8x32xf32>,
    return
  }
}

</mosaic_0001>

<llo_original>
// kernel: encoder_forward.1
$region0: #{encoder_forward.1}
  #allocation0 [shape = 'u32[]', space=smem, size = 0x4, offset = 0x4, fixed_abs, tag = 'smem constant byte address 0x4 - core index']
  #allocation1 [shape = 'u32[72,128]{1,0:T(1,128)}', space=vmem, size = 0x9000, scoped, tag = 'internal scratch']
  #allocation2 [shape = 'f32[8,8,32]{2,1,0:T(8,128)}', space=vmem, size = 0x8000, scoped, tag = 'scratch operand']
  #allocation3 [shape = 'f32[8,8,128]{2,1,0:T(8,128)}', space=vmem, size = 0x8000, scoped, tag = 'scratch operand']
  #allocation4 [shape = 'f32[8,32]{1,0:T(8,128)}', space=vmem, size = 0x1000, scoped, tag = 'scratch operand']
  #allocation5 [shape = 'f32[8,32]{1,0:T(8,128)}', space=vmem, size = 0x1000, scoped, tag = 'scratch operand']
  %s0 = inlined_call_operand.vmem [shape: f32[8,8,32], index: 0, kind: input, shape index: {}]
  %s1 = inlined_call_operand.vmem [shape: f32[32,128], index: 1, kind: input, shape index: {}]
  %s2 = inlined_call_operand.vmem [shape: f32[32,128], index: 2, kind: input, shape index: {}]
  %s3 = inlined_call_operand.vmem [shape: f32[1,128], index: 3, kind: input, shape index: {}]
  %s4 = inlined_call_operand.vmem [shape: f32[32,128], index: 4, kind: input, shape index: {}]
  %s5 = inlined_call_operand.vmem [shape: f32[32,128], index: 5, kind: input, shape index: {}]
  %s6 = inlined_call_operand.vmem [shape: f32[1,128], index: 6, kind: input, shape index: {}]
  %s7 = inlined_call_operand.vmem [shape: f32[2,8,32], index: 7, kind: output, shape index: {0}]
  %s8 = inlined_call_operand.vmem [shape: f32[2,8,32], index: 8, kind: output, shape index: {1}]
  %9 = xla_tuple %s7, %s8
  %s10 = sld [smem:[#allocation0]]
  $region46: #{encoder_forward.1} parent=0
    _
  %s12 = ssub.s32 1, %s10
  %s13 = scalar_select 0, %s12, %s10
  // Predicated region
  $region2: #{encoder_forward.1} parent=0 // pred_check
    _
  $region3: #{encoder_forward.1} parent=0 // pred_check_branch
    %15 = sbr.rel (0) target = $region5
  $region4: #{encoder_forward.1} parent=0 // pred_region
    _
  $region5: #{encoder_forward.1} parent=0 // pred_fallthru
    _
  // Predicated region
  $region6: #{encoder_forward.1} parent=0 // pred_check
    _
  $region7: #{encoder_forward.1} parent=0 // pred_check_branch
    %17 = sbr.rel (0) target = $region9
  $region8: #{encoder_forward.1} parent=0 // pred_region
    _
  $region9: #{encoder_forward.1} parent=0 // pred_fallthru
    _
  // Predicated region
  $region10: #{encoder_forward.1} parent=0 // pred_check
    _
  $region11: #{encoder_forward.1} parent=0 // pred_check_branch
    %19 = sbr.rel (0) target = $region13
  $region12: #{encoder_forward.1} parent=0 // pred_region
    _
  $region13: #{encoder_forward.1} parent=0 // pred_fallthru
    _
  // Predicated region
  $region14: #{encoder_forward.1} parent=0 // pred_check
    _
  $region15: #{encoder_forward.1} parent=0 // pred_check_branch
    %21 = sbr.rel (0) target = $region17
  $region16: #{encoder_forward.1} parent=0 // pred_region
    _
  $region17: #{encoder_forward.1} parent=0 // pred_fallthru
    _
  // Predicated region
  $region18: #{encoder_forward.1} parent=0 // pred_check
    _
  $region19: #{encoder_forward.1} parent=0 // pred_check_branch
    %23 = sbr.rel (0) target = $region21
  $region20: #{encoder_forward.1} parent=0 // pred_region
    _
  $region21: #{encoder_forward.1} parent=0 // pred_fallthru
    _
  // Predicated region
  $region22: #{encoder_forward.1} parent=0 // pred_check
    _
  $region23: #{encoder_forward.1} parent=0 // pred_check_branch
    %25 = sbr.rel (0) target = $region25
  $region24: #{encoder_forward.1} parent=0 // pred_region
    _
  $region25: #{encoder_forward.1} parent=0 // pred_fallthru
    _
  // Predicated region
  $region26: #{encoder_forward.1} parent=0 // pred_check
    _
  $region27: #{encoder_forward.1} parent=0 // pred_check_branch
    %27 = sbr.rel (0) target = $region29
  $region28: #{encoder_forward.1} parent=0 // pred_region
    _
  $region29: #{encoder_forward.1} parent=0 // pred_fallthru
    _
  %v28 = vld [vmem:[%s1] sm:$0xff]
  %v29 = vld [vmem:[%s1 + $0x8] sm:$0xff]
  %v30 = vld [vmem:[%s1 + $0x10] sm:$0xff]
  %v31 = vld [vmem:[%s1 + $0x18] sm:$0xff]
  %v32 = vld [vmem:[%s2] sm:$0xff]
  %v33 = vld [vmem:[%s2 + $0x8] sm:$0xff]
  %v34 = vld [vmem:[%s2 + $0x10] sm:$0xff]
  %v35 = vld [vmem:[%s2 + $0x18] sm:$0xff]
  %v36 = vld [vmem:[%s3] sm:$0x1]
  %v37 = vld [vmem:[%s0] sm:$0xff]
  %v38 = vld [vmem:[%s0 + $0x8] sm:$0xff]
  %v39 = vld [vmem:[%s0 + $0x10] sm:$0xff]
  %v40 = vld [vmem:[%s0 + $0x18] sm:$0xff]
  %v41 = vld [vmem:[%s0 + $0x20] sm:$0xff]
  %v42 = vld [vmem:[%s0 + $0x28] sm:$0xff]
  %v43 = vld [vmem:[%s0 + $0x30] sm:$0xff]
  %v44 = vld [vmem:[%s0 + $0x38] sm:$0xff]
  %v46 = vperm.slane %v36, 0
  %vm48 = vcmask 261120
  %v50 = vsel %vm48, %v37, 0
  %v53 = vsel %vm48, %v38, 0
  %v56 = vsel %vm48, %v39, 0
  %v59 = vsel %vm48, %v40, 0
  %v62 = vsel %vm48, %v41, 0
  %v65 = vsel %vm48, %v42, 0
  %v68 = vsel %vm48, %v43, 0
  %v71 = vsel %vm48, %v44, 0
  %73 = vmatpush.msra.mxu0 0.0
  %74 = vmatpush.msra.mxu0 0.0
  %75 = vmatpush.msra.mxu0 0.0
  %76 = vmatpush.msra.mxu0 0.0
  %77 = vmatpush.msra.mxu0 0.0
  %78 = vmatpush.msra.mxu0 0.0
  %79 = vmatpush.msra.mxu0 0.0
  %80 = vmatpush.msra.mxu0 0.0
  %81 = vmatpush.msra.mxu0 0.0
  %82 = vmatpush.msra.mxu0 0.0
  %83 = vmatpush.msra.mxu0 0.0
  %84 = vmatpush.msra.mxu0 0.0
  %85 = vmatpush.msra.mxu0 %v31
  %86 = vmatpush.msra.mxu0 %v30
  %87 = vmatpush.msra.mxu0 %v29
  %88 = vmatpush.msra.mxu0 %v28
  %89 = vmatmul.f32.gmra.mxu0 %v50
  %v90 = vpop.f32.mrf.mxu0
  %v91 = vadd.f32 %v46, %v90
  %92 = vmatmul.f32.gmra.mxu0 %v53
  %v93 = vpop.f32.mrf.mxu0
  %v94 = vadd.f32 %v46, %v93
  %95 = vmatmul.f32.gmra.mxu0 %v56
  %v96 = vpop.f32.mrf.mxu0
  %v97 = vadd.f32 %v46, %v96
  %98 = vmatmul.f32.gmra.mxu0 %v59
  %v99 = vpop.f32.mrf.mxu0
  %v100 = vadd.f32 %v46, %v99
  %101 = vmatmul.f32.gmra.mxu0 %v62
  %v102 = vpop.f32.mrf.mxu0
  %v103 = vadd.f32 %v46, %v102
  %104 = vmatmul.f32.gmra.mxu0 %v65
  %v105 = vpop.f32.mrf.mxu0
  %v106 = vadd.f32 %v46, %v105
  %107 = vmatmul.f32.gmra.mxu0 %v68
  %v108 = vpop.f32.mrf.mxu0
  %v109 = vadd.f32 %v46, %v108
  %110 = vmatmul.f32.gmra.mxu0 %v71
  %v111 = vpop.f32.mrf.mxu0
  %v112 = vadd.f32 %v46, %v111
  %113 = vdwg.mxu0
  %114 = vst [vmem:[#allocation3] sm:$0xff] %v91
  %115 = vst [vmem:[#allocation3 + $0x8] sm:$0xff] %v94
  %116 = vst [vmem:[#allocation3 + $0x10] sm:$0xff] %v97
  %117 = vst [vmem:[#allocation3 + $0x18] sm:$0xff] %v100
  %118 = vst [vmem:[#allocation3 + $0x20] sm:$0xff] %v103
  %119 = vst [vmem:[#allocation3 + $0x28] sm:$0xff] %v106
  %120 = vst [vmem:[#allocation3 + $0x30] sm:$0xff] %v109
  %121 = vst [vmem:[#allocation3 + $0x38] sm:$0xff] %v112
  %122 = vst.msk [vmem:[#allocation4] sm:$0xff] %vm48, 0.0
  %123 = vst.msk [vmem:[#allocation5] sm:$0xff] %vm48, 0.0
  %v124 = vld [vmem:[#allocation4] sm:$0xff]
  %v125 = vld [vmem:[#allocation5] sm:$0xff]
  %v126 = vld [vmem:[#allocation3] sm:$0xff]
  %v128 = vsel %vm48, %v124, 0
  %130 = vmatpush.msra.mxu0 0.0
  %131 = vmatpush.msra.mxu0 0.0
  %132 = vmatpush.msra.mxu0 0.0
  %133 = vmatpush.msra.mxu0 0.0
  %134 = vmatpush.msra.mxu0 0.0
  %135 = vmatpush.msra.mxu0 0.0
  %136 = vmatpush.msra.mxu0 0.0
  %137 = vmatpush.msra.mxu0 0.0
  %138 = vmatpush.msra.mxu0 0.0
  %139 = vmatpush.msra.mxu0 0.0
  %140 = vmatpush.msra.mxu0 0.0
  %141 = vmatpush.msra.mxu0 0.0
  %142 = vmatpush.msra.mxu0 %v35
  %143 = vmatpush.msra.mxu0 %v34
  %144 = vmatpush.msra.mxu0 %v33
  %145 = vmatpush.msra.mxu0 %v32
  %146 = vmatmul.f32.gmra.mxu0 %v128
  %v147 = vpop.f32.mrf.mxu0
  %v148 = vadd.f32 0.0, %v147
  %149 = vdwg.mxu0
  %v150 = vadd.f32 %v126, %v148
  %v151 = vxor.u32 %v150, 2147483648
  %v152 = vmul.f32 %v151, 1.442695
  %v153 = vpow.pop %v152
  %v154 = vadd.f32 %v153, 1.0
  %v155 = vrcp.pop %v154
  %v156 = vmul.f32 %v154, %v155
  %v157 = vsub.f32 1.0, %v156
  %v158 = vmul.f32 %v155, %v157
  %v159 = vadd.f32 %v155, %v158
  %vm160 = vweird.f32 %v154
  %vm161 = vweird.f32 %v155
  %vm162 = vmor %vm160, %vm161
  %v163 = vsel %vm162, %v155, %v159
  %v164 = vand.u32 2147483647, %v154
  %vm165 = vcmp.eq.f32.partialorder %v164, 8.507059e+37
  %v166 = vand.u32 %v154, 2147483648
  %v167 = vor.u32 1.1754944e-38, %v166
  %v168 = vsel %vm165, %v167, %v163
  %v169 = vmul.f32 1.0, %v168
  %v170 = vtanh.pop %v150
  %172 = vrot.lane.b32.xlu0 %v125, 32
  %v173 = vpop.permute.xlu0 %172
  %v175 = vmul.f32 %v169, %v173
  %177 = vrot.lane.b32.xlu0 %v170, 64
  %v178 = vpop.permute.xlu0 %177
  %v180 = vmul.f32 %v169, %v178
  %182 = vrot.lane.b32.xlu0 %v180, 32
  %v183 = vpop.permute.xlu0 %182
  %v185 = vadd.f32 %v175, %v183
  %v186 = vtanh.pop %v185
  %188 = vrot.lane.b32.xlu0 %v186, 64
  %v189 = vpop.permute.xlu0 %188
  %v191 = vmul.f32 %v169, %v189
  %193 = vrot.lane.b32.xlu0 %v191, 32
  %v194 = vpop.permute.xlu0 %193
  %196 = vst.msk [vmem:[#allocation4] sm:$0xff] %vm48, %v194
  %198 = vrot.lane.b32.xlu0 %v185, 96
  %v199 = vpop.permute.xlu0 %198
  %201 = vst.msk [vmem:[#allocation5] sm:$0xff] %vm48, %v199
  %202 = vst.msk [vmem:[#allocation2] sm:$0xff] %vm48, %v194
  %v203 = vld [vmem:[#allocation4] sm:$0xff]
  %v204 = vld [vmem:[#allocation5] sm:$0xff]
  %s205 = scalar_lea.vmem [#allocation3], 8
  %v206 = vld [vmem:[%s205] sm:$0xff]
  %v208 = vsel %vm48, %v203, 0
  %210 = vmatpush.msra.mxu0 0.0
  %211 = vmatpush.msra.mxu0 0.0
  %212 = vmatpush.msra.mxu0 0.0
  %213 = vmatpush.msra.mxu0 0.0
  %214 = vmatpush.msra.mxu0 0.0
  %215 = vmatpush.msra.mxu0 0.0
  %216 = vmatpush.msra.mxu0 0.0
  %217 = vmatpush.msra.mxu0 0.0
  %218 = vmatpush.msra.mxu0 0.0
  %219 = vmatpush.msra.mxu0 0.0
  %220 = vmatpush.msra.mxu0 0.0
  %221 = vmatpush.msra.mxu0 0.0
  %222 = vmatpush.msra.mxu0 %v35
  %223 = vmatpush.msra.mxu0 %v34
  %224 = vmatpush.msra.mxu0 %v33
  %225 = vmatpush.msra.mxu0 %v32
  %226 = vmatmul.f32.gmra.mxu0 %v208
  %v227 = vpop.f32.mrf.mxu0
  %v228 = vadd.f32 0.0, %v227
  %229 = vdwg.mxu0
  %v230 = vadd.f32 %v206, %v228
  %v231 = vxor.u32 %v230, 2147483648
  %v232 = vmul.f32 %v231, 1.442695
  %v233 = vpow.pop %v232
  %v234 = vadd.f32 %v233, 1.0
  %v235 = vrcp.pop %v234
  %v236 = vmul.f32 %v234, %v235
  %v237 = vsub.f32 1.0, %v236
  %v238 = vmul.f32 %v235, %v237
  %v239 = vadd.f32 %v235, %v238
  %vm240 = vweird.f32 %v234
  %vm241 = vweird.f32 %v235
  %vm242 = vmor %vm240, %vm241
  %v243 = vsel %vm242, %v235, %v239
  %v244 = vand.u32 2147483647, %v234
  %vm245 = vcmp.eq.f32.partialorder %v244, 8.507059e+37
  %v246 = vand.u32 %v234, 2147483648
  %v247 = vor.u32 1.1754944e-38, %v246
  %v248 = vsel %vm245, %v247, %v243
  %v249 = vmul.f32 1.0, %v248
  %v250 = vtanh.pop %v230
  %252 = vrot.lane.b32.xlu0 %v204, 32
  %v253 = vpop.permute.xlu0 %252
  %v255 = vmul.f32 %v249, %v253
  %257 = vrot.lane.b32.xlu0 %v250, 64
  %v258 = vpop.permute.xlu0 %257
  %v260 = vmul.f32 %v249, %v258
  %262 = vrot.lane.b32.xlu0 %v260, 32
  %v263 = vpop.permute.xlu0 %262
  %v265 = vadd.f32 %v255, %v263
  %v266 = vtanh.pop %v265
  %268 = vrot.lane.b32.xlu0 %v266, 64
  %v269 = vpop.permute.xlu0 %268
  %v271 = vmul.f32 %v249, %v269
  %273 = vrot.lane.b32.xlu0 %v271, 32
  %v274 = vpop.permute.xlu0 %273
  %276 = vst.msk [vmem:[#allocation4] sm:$0xff] %vm48, %v274
  %278 = vrot.lane.b32.xlu0 %v265, 96
  %v279 = vpop.permute.xlu0 %278
  %281 = vst.msk [vmem:[#allocation5] sm:$0xff] %vm48, %v279
  %s282 = scalar_lea.vmem [#allocation2], 8
  %283 = vst.msk [vmem:[%s282] sm:$0xff] %vm48, %v274
  %v284 = vld [vmem:[#allocation4] sm:$0xff]
  %v285 = vld [vmem:[#allocation5] sm:$0xff]
  %s286 = scalar_lea.vmem [#allocation3], 16
  %v287 = vld [vmem:[%s286] sm:$0xff]
  %v289 = vsel %vm48, %v284, 0
  %291 = vmatpush.msra.mxu0 0.0
  %292 = vmatpush.msra.mxu0 0.0
  %293 = vmatpush.msra.mxu0 0.0
  %294 = vmatpush.msra.mxu0 0.0
  %295 = vmatpush.msra.mxu0 0.0
  %296 = vmatpush.msra.mxu0 0.0
  %297 = vmatpush.msra.mxu0 0.0
  %298 = vmatpush.msra.mxu0 0.0
  %299 = vmatpush.msra.mxu0 0.0
  %300 = vmatpush.msra.mxu0 0.0
  %301 = vmatpush.msra.mxu0 0.0
  %302 = vmatpush.msra.mxu0 0.0
  %303 = vmatpush.msra.mxu0 %v35
  %304 = vmatpush.msra.mxu0 %v34
  %305 = vmatpush.msra.mxu0 %v33
  %306 = vmatpush.msra.mxu0 %v32
  %307 = vmatmul.f32.gmra.mxu0 %v289
  %v308 = vpop.f32.mrf.mxu0
  %v309 = vadd.f32 0.0, %v308
  %310 = vdwg.mxu0
  %v311 = vadd.f32 %v287, %v309
  %v312 = vxor.u32 %v311, 2147483648
  %v313 = vmul.f32 %v312, 1.442695
  %v314 = vpow.pop %v313
  %v315 = vadd.f32 %v314, 1.0
  %v316 = vrcp.pop %v315
  %v317 = vmul.f32 %v315, %v316
  %v318 = vsub.f32 1.0, %v317
  %v319 = vmul.f32 %v316, %v318
  %v320 = vadd.f32 %v316, %v319
  %vm321 = vweird.f32 %v315
  %vm322 = vweird.f32 %v316
  %vm323 = vmor %vm321, %vm322
  %v324 = vsel %vm323, %v316, %v320
  %v325 = vand.u32 2147483647, %v315
  %vm326 = vcmp.eq.f32.partialorder %v325, 8.507059e+37
  %v327 = vand.u32 %v315, 2147483648
  %v328 = vor.u32 1.1754944e-38, %v327
  %v329 = vsel %vm326, %v328, %v324
  %v330 = vmul.f32 1.0, %v329
  %v331 = vtanh.pop %v311
  %333 = vrot.lane.b32.xlu0 %v285, 32
  %v334 = vpop.permute.xlu0 %333
  %v336 = vmul.f32 %v330, %v334
  %338 = vrot.lane.b32.xlu0 %v331, 64
  %v339 = vpop.permute.xlu0 %338
  %v341 = vmul.f32 %v330, %v339
  %343 = vrot.lane.b32.xlu0 %v341, 32
  %v344 = vpop.permute.xlu0 %343
  %v346 = vadd.f32 %v336, %v344
  %v347 = vtanh.pop %v346
  %349 = vrot.lane.b32.xlu0 %v347, 64
  %v350 = vpop.permute.xlu0 %349
  %v352 = vmul.f32 %v330, %v350
  %354 = vrot.lane.b32.xlu0 %v352, 32
  %v355 = vpop.permute.xlu0 %354
  %357 = vst.msk [vmem:[#allocation4] sm:$0xff] %vm48, %v355
  %359 = vrot.lane.b32.xlu0 %v346, 96
  %v360 = vpop.permute.xlu0 %359
  %362 = vst.msk [vmem:[#allocation5] sm:$0xff] %vm48, %v360
  %s363 = scalar_lea.vmem [#allocation2], 16
  %364 = vst.msk [vmem:[%s363] sm:$0xff] %vm48, %v355
  %v365 = vld [vmem:[#allocation4] sm:$0xff]
  %v366 = vld [vmem:[#allocation5] sm:$0xff]
  %s367 = scalar_lea.vmem [#allocation3], 24
  %v368 = vld [vmem:[%s367] sm:$0xff]
  %v370 = vsel %vm48, %v365, 0
  %372 = vmatpush.msra.mxu0 0.0
  %373 = vmatpush.msra.mxu0 0.0
  %374 = vmatpush.msra.mxu0 0.0
  %375 = vmatpush.msra.mxu0 0.0
  %376 = vmatpush.msra.mxu0 0.0
  %377 = vmatpush.msra.mxu0 0.0
  %378 = vmatpush.msra.mxu0 0.0
  %379 = vmatpush.msra.mxu0 0.0
  %380 = vmatpush.msra.mxu0 0.0
  %381 = vmatpush.msra.mxu0 0.0
  %382 = vmatpush.msra.mxu0 0.0
  %383 = vmatpush.msra.mxu0 0.0
  %384 = vmatpush.msra.mxu0 %v35
  %385 = vmatpush.msra.mxu0 %v34
  %386 = vmatpush.msra.mxu0 %v33
  %387 = vmatpush.msra.mxu0 %v32
  %388 = vmatmul.f32.gmra.mxu0 %v370
  %v389 = vpop.f32.mrf.mxu0
  %v390 = vadd.f32 0.0, %v389
  %391 = vdwg.mxu0
  %v392 = vadd.f32 %v368, %v390
  %v393 = vxor.u32 %v392, 2147483648
  %v394 = vmul.f32 %v393, 1.442695
  %v395 = vpow.pop %v394
  %v396 = vadd.f32 %v395, 1.0
  %v397 = vrcp.pop %v396
  %v398 = vmul.f32 %v396, %v397
  %v399 = vsub.f32 1.0, %v398
  %v400 = vmul.f32 %v397, %v399
  %v401 = vadd.f32 %v397, %v400
  %vm402 = vweird.f32 %v396
  %vm403 = vweird.f32 %v397
  %vm404 = vmor %vm402, %vm403
  %v405 = vsel %vm404, %v397, %v401
  %v406 = vand.u32 2147483647, %v396
  %vm407 = vcmp.eq.f32.partialorder %v406, 8.507059e+37
  %v408 = vand.u32 %v396, 2147483648
  %v409 = vor.u32 1.1754944e-38, %v408
  %v410 = vsel %vm407, %v409, %v405
  %v411 = vmul.f32 1.0, %v410
  %v412 = vtanh.pop %v392
  %414 = vrot.lane.b32.xlu0 %v366, 32
  %v415 = vpop.permute.xlu0 %414
  %v417 = vmul.f32 %v411, %v415
  %419 = vrot.lane.b32.xlu0 %v412, 64
  %v420 = vpop.permute.xlu0 %419
  %v422 = vmul.f32 %v411, %v420
  %424 = vrot.lane.b32.xlu0 %v422, 32
  %v425 = vpop.permute.xlu0 %424
  %v427 = vadd.f32 %v417, %v425
  %v428 = vtanh.pop %v427
  %430 = vrot.lane.b32.xlu0 %v428, 64
  %v431 = vpop.permute.xlu0 %430
  %v433 = vmul.f32 %v411, %v431
  %435 = vrot.lane.b32.xlu0 %v433, 32
  %v436 = vpop.permute.xlu0 %435
  %438 = vst.msk [vmem:[#allocation4] sm:$0xff] %vm48, %v436
  %440 = vrot.lane.b32.xlu0 %v427, 96
  %v441 = vpop.permute.xlu0 %440
  %443 = vst.msk [vmem:[#allocation5] sm:$0xff] %vm48, %v441
  %s444 = scalar_lea.vmem [#allocation2], 24
  %445 = vst.msk [vmem:[%s444] sm:$0xff] %vm48, %v436
  %v446 = vld [vmem:[#allocation4] sm:$0xff]
  %v447 = vld [vmem:[#allocation5] sm:$0xff]
  %s448 = scalar_lea.vmem [#allocation3], 32
  %v449 = vld [vmem:[%s448] sm:$0xff]
  %v451 = vsel %vm48, %v446, 0
  %453 = vmatpush.msra.mxu0 0.0
  %454 = vmatpush.msra.mxu0 0.0
  %455 = vmatpush.msra.mxu0 0.0
  %456 = vmatpush.msra.mxu0 0.0
  %457 = vmatpush.msra.mxu0 0.0
  %458 = vmatpush.msra.mxu0 0.0
  %459 = vmatpush.msra.mxu0 0.0
  %460 = vmatpush.msra.mxu0 0.0
  %461 = vmatpush.msra.mxu0 0.0
  %462 = vmatpush.msra.mxu0 0.0
  %463 = vmatpush.msra.mxu0 0.0
  %464 = vmatpush.msra.mxu0 0.0
  %465 = vmatpush.msra.mxu0 %v35
  %466 = vmatpush.msra.mxu0 %v34
  %467 = vmatpush.msra.mxu0 %v33
  %468 = vmatpush.msra.mxu0 %v32
  %469 = vmatmul.f32.gmra.mxu0 %v451
  %v470 = vpop.f32.mrf.mxu0
  %v471 = vadd.f32 0.0, %v470
  %472 = vdwg.mxu0
  %v473 = vadd.f32 %v449, %v471
  %v474 = vxor.u32 %v473, 2147483648
  %v475 = vmul.f32 %v474, 1.442695
  %v476 = vpow.pop %v475
  %v477 = vadd.f32 %v476, 1.0
  %v478 = vrcp.pop %v477
  %v479 = vmul.f32 %v477, %v478
  %v480 = vsub.f32 1.0, %v479
  %v481 = vmul.f32 %v478, %v480
  %v482 = vadd.f32 %v478, %v481
  %vm483 = vweird.f32 %v477
  %vm484 = vweird.f32 %v478
  %vm485 = vmor %vm483, %vm484
  %v486 = vsel %vm485, %v478, %v482
  %v487 = vand.u32 2147483647, %v477
  %vm488 = vcmp.eq.f32.partialorder %v487, 8.507059e+37
  %v489 = vand.u32 %v477, 2147483648
  %v490 = vor.u32 1.1754944e-38, %v489
  %v491 = vsel %vm488, %v490, %v486
  %v492 = vmul.f32 1.0, %v491
  %v493 = vtanh.pop %v473
  %495 = vrot.lane.b32.xlu0 %v447, 32
  %v496 = vpop.permute.xlu0 %495
  %v498 = vmul.f32 %v492, %v496
  %500 = vrot.lane.b32.xlu0 %v493, 64
  %v501 = vpop.permute.xlu0 %500
  %v503 = vmul.f32 %v492, %v501
  %505 = vrot.lane.b32.xlu0 %v503, 32
  %v506 = vpop.permute.xlu0 %505
  %v508 = vadd.f32 %v498, %v506
  %v509 = vtanh.pop %v508
  %511 = vrot.lane.b32.xlu0 %v509, 64
  %v512 = vpop.permute.xlu0 %511
  %v514 = vmul.f32 %v492, %v512
  %516 = vrot.lane.b32.xlu0 %v514, 32
  %v517 = vpop.permute.xlu0 %516
  %519 = vst.msk [vmem:[#allocation4] sm:$0xff] %vm48, %v517
  %521 = vrot.lane.b32.xlu0 %v508, 96
  %v522 = vpop.permute.xlu0 %521
  %524 = vst.msk [vmem:[#allocation5] sm:$0xff] %vm48, %v522
  %s525 = scalar_lea.vmem [#allocation2], 32
  %526 = vst.msk [vmem:[%s525] sm:$0xff] %vm48, %v517
  %v527 = vld [vmem:[#allocation4] sm:$0xff]
  %v528 = vld [vmem:[#allocation5] sm:$0xff]
  %s529 = scalar_lea.vmem [#allocation3], 40
  %v530 = vld [vmem:[%s529] sm:$0xff]
  %v532 = vsel %vm48, %v527, 0
  %534 = vmatpush.msra.mxu0 0.0
  %535 = vmatpush.msra.mxu0 0.0
  %536 = vmatpush.msra.mxu0 0.0
  %537 = vmatpush.msra.mxu0 0.0
  %538 = vmatpush.msra.mxu0 0.0
  %539 = vmatpush.msra.mxu0 0.0
  %540 = vmatpush.msra.mxu0 0.0
  %541 = vmatpush.msra.mxu0 0.0
  %542 = vmatpush.msra.mxu0 0.0
  %543 = vmatpush.msra.mxu0 0.0
  %544 = vmatpush.msra.mxu0 0.0
  %545 = vmatpush.msra.mxu0 0.0
  %546 = vmatpush.msra.mxu0 %v35
  %547 = vmatpush.msra.mxu0 %v34
  %548 = vmatpush.msra.mxu0 %v33
  %549 = vmatpush.msra.mxu0 %v32
  %550 = vmatmul.f32.gmra.mxu0 %v532
  %v551 = vpop.f32.mrf.mxu0
  %v552 = vadd.f32 0.0, %v551
  %553 = vdwg.mxu0
  %v554 = vadd.f32 %v530, %v552
  %v555 = vxor.u32 %v554, 2147483648
  %v556 = vmul.f32 %v555, 1.442695
  %v557 = vpow.pop %v556
  %v558 = vadd.f32 %v557, 1.0
  %v559 = vrcp.pop %v558
  %v560 = vmul.f32 %v558, %v559
  %v561 = vsub.f32 1.0, %v560
  %v562 = vmul.f32 %v559, %v561
  %v563 = vadd.f32 %v559, %v562
  %vm564 = vweird.f32 %v558
  %vm565 = vweird.f32 %v559
  %vm566 = vmor %vm564, %vm565
  %v567 = vsel %vm566, %v559, %v563
  %v568 = vand.u32 2147483647, %v558
  %vm569 = vcmp.eq.f32.partialorder %v568, 8.507059e+37
  %v570 = vand.u32 %v558, 2147483648
  %v571 = vor.u32 1.1754944e-38, %v570
  %v572 = vsel %vm569, %v571, %v567
  %v573 = vmul.f32 1.0, %v572
  %v574 = vtanh.pop %v554
  %576 = vrot.lane.b32.xlu0 %v528, 32
  %v577 = vpop.permute.xlu0 %576
  %v579 = vmul.f32 %v573, %v577
  %581 = vrot.lane.b32.xlu0 %v574, 64
  %v582 = vpop.permute.xlu0 %581
  %v584 = vmul.f32 %v573, %v582
  %586 = vrot.lane.b32.xlu0 %v584, 32
  %v587 = vpop.permute.xlu0 %586
  %v589 = vadd.f32 %v579, %v587
  %v590 = vtanh.pop %v589
  %592 = vrot.lane.b32.xlu0 %v590, 64
  %v593 = vpop.permute.xlu0 %592
  %v595 = vmul.f32 %v573, %v593
  %597 = vrot.lane.b32.xlu0 %v595, 32
  %v598 = vpop.permute.xlu0 %597
  %600 = vst.msk [vmem:[#allocation4] sm:$0xff] %vm48, %v598
  %602 = vrot.lane.b32.xlu0 %v589, 96
  %v603 = vpop.permute.xlu0 %602
  %605 = vst.msk [vmem:[#allocation5] sm:$0xff] %vm48, %v603
  %s606 = scalar_lea.vmem [#allocation2], 40
  %607 = vst.msk [vmem:[%s606] sm:$0xff] %vm48, %v598
  %v608 = vld [vmem:[#allocation4] sm:$0xff]
  %v609 = vld [vmem:[#allocation5] sm:$0xff]
  %s610 = scalar_lea.vmem [#allocation3], 48
  %v611 = vld [vmem:[%s610] sm:$0xff]
  %v613 = vsel %vm48, %v608, 0
  %615 = vmatpush.msra.mxu0 0.0
  %616 = vmatpush.msra.mxu0 0.0
  %617 = vmatpush.msra.mxu0 0.0
  %618 = vmatpush.msra.mxu0 0.0
  %619 = vmatpush.msra.mxu0 0.0
  %620 = vmatpush.msra.mxu0 0.0
  %621 = vmatpush.msra.mxu0 0.0
  %622 = vmatpush.msra.mxu0 0.0
  %623 = vmatpush.msra.mxu0 0.0
  %624 = vmatpush.msra.mxu0 0.0
  %625 = vmatpush.msra.mxu0 0.0
  %626 = vmatpush.msra.mxu0 0.0
  %627 = vmatpush.msra.mxu0 %v35
  %628 = vmatpush.msra.mxu0 %v34
  %629 = vmatpush.msra.mxu0 %v33
  %630 = vmatpush.msra.mxu0 %v32
  %631 = vmatmul.f32.gmra.mxu0 %v613
  %v632 = vpop.f32.mrf.mxu0
  %v633 = vadd.f32 0.0, %v632
  %634 = vdwg.mxu0
  %v635 = vadd.f32 %v611, %v633
  %v636 = vxor.u32 %v635, 2147483648
  %v637 = vmul.f32 %v636, 1.442695
  %v638 = vpow.pop %v637
  %v639 = vadd.f32 %v638, 1.0
  %v640 = vrcp.pop %v639
  %v641 = vmul.f32 %v639, %v640
  %v642 = vsub.f32 1.0, %v641
  %v643 = vmul.f32 %v640, %v642
  %v644 = vadd.f32 %v640, %v643
  %vm645 = vweird.f32 %v639
  %vm646 = vweird.f32 %v640
  %vm647 = vmor %vm645, %vm646
  %v648 = vsel %vm647, %v640, %v644
  %v649 = vand.u32 2147483647, %v639
  %vm650 = vcmp.eq.f32.partialorder %v649, 8.507059e+37
  %v651 = vand.u32 %v639, 2147483648
  %v652 = vor.u32 1.1754944e-38, %v651
  %v653 = vsel %vm650, %v652, %v648
  %v654 = vmul.f32 1.0, %v653
  %v655 = vtanh.pop %v635
  %657 = vrot.lane.b32.xlu0 %v609, 32
  %v658 = vpop.permute.xlu0 %657
  %v660 = vmul.f32 %v654, %v658
  %662 = vrot.lane.b32.xlu0 %v655, 64
  %v663 = vpop.permute.xlu0 %662
  %v665 = vmul.f32 %v654, %v663
  %667 = vrot.lane.b32.xlu0 %v665, 32
  %v668 = vpop.permute.xlu0 %667
  %v670 = vadd.f32 %v660, %v668
  %v671 = vtanh.pop %v670
  %673 = vrot.lane.b32.xlu0 %v671, 64
  %v674 = vpop.permute.xlu0 %673
  %v676 = vmul.f32 %v654, %v674
  %678 = vrot.lane.b32.xlu0 %v676, 32
  %v679 = vpop.permute.xlu0 %678
  %681 = vst.msk [vmem:[#allocation4] sm:$0xff] %vm48, %v679
  %683 = vrot.lane.b32.xlu0 %v670, 96
  %v684 = vpop.permute.xlu0 %683
  %686 = vst.msk [vmem:[#allocation5] sm:$0xff] %vm48, %v684
  %s687 = scalar_lea.vmem [#allocation2], 48
  %688 = vst.msk [vmem:[%s687] sm:$0xff] %vm48, %v679
  %v689 = vld [vmem:[#allocation4] sm:$0xff]
  %v690 = vld [vmem:[#allocation5] sm:$0xff]
  %s691 = scalar_lea.vmem [#allocation3], 56
  %v692 = vld [vmem:[%s691] sm:$0xff]
  %v694 = vsel %vm48, %v689, 0
  %696 = vmatpush.msra.mxu0 0.0
  %697 = vmatpush.msra.mxu0 0.0
  %698 = vmatpush.msra.mxu0 0.0
  %699 = vmatpush.msra.mxu0 0.0
  %700 = vmatpush.msra.mxu0 0.0
  %701 = vmatpush.msra.mxu0 0.0
  %702 = vmatpush.msra.mxu0 0.0
  %703 = vmatpush.msra.mxu0 0.0
  %704 = vmatpush.msra.mxu0 0.0
  %705 = vmatpush.msra.mxu0 0.0
  %706 = vmatpush.msra.mxu0 0.0
  %707 = vmatpush.msra.mxu0 0.0
  %708 = vmatpush.msra.mxu0 %v35
  %709 = vmatpush.msra.mxu0 %v34
  %710 = vmatpush.msra.mxu0 %v33
  %711 = vmatpush.msra.mxu0 %v32
  %712 = vmatmul.f32.gmra.mxu0 %v694
  %v713 = vpop.f32.mrf.mxu0
  %v714 = vadd.f32 0.0, %v713
  %715 = vdwg.mxu0
  %v716 = vadd.f32 %v692, %v714
  %v717 = vxor.u32 %v716, 2147483648
  %v718 = vmul.f32 %v717, 1.442695
  %v719 = vpow.pop %v718
  %v720 = vadd.f32 %v719, 1.0
  %v721 = vrcp.pop %v720
  %v722 = vmul.f32 %v720, %v721
  %v723 = vsub.f32 1.0, %v722
  %v724 = vmul.f32 %v721, %v723
  %v725 = vadd.f32 %v721, %v724
  %vm726 = vweird.f32 %v720
  %vm727 = vweird.f32 %v721
  %vm728 = vmor %vm726, %vm727
  %v729 = vsel %vm728, %v721, %v725
  %v730 = vand.u32 2147483647, %v720
  %vm731 = vcmp.eq.f32.partialorder %v730, 8.507059e+37
  %v732 = vand.u32 %v720, 2147483648
  %v733 = vor.u32 1.1754944e-38, %v732
  %v734 = vsel %vm731, %v733, %v729
  %v735 = vmul.f32 1.0, %v734
  %v736 = vtanh.pop %v716
  %738 = vrot.lane.b32.xlu0 %v690, 32
  %v739 = vpop.permute.xlu0 %738
  %v741 = vmul.f32 %v735, %v739
  %743 = vrot.lane.b32.xlu0 %v736, 64
  %v744 = vpop.permute.xlu0 %743
  %v746 = vmul.f32 %v735, %v744
  %748 = vrot.lane.b32.xlu0 %v746, 32
  %v749 = vpop.permute.xlu0 %748
  %v751 = vadd.f32 %v741, %v749
  %v752 = vtanh.pop %v751
  %754 = vrot.lane.b32.xlu0 %v752, 64
  %v755 = vpop.permute.xlu0 %754
  %v757 = vmul.f32 %v735, %v755
  %759 = vrot.lane.b32.xlu0 %v757, 32
  %v760 = vpop.permute.xlu0 %759
  %762 = vst.msk [vmem:[#allocation4] sm:$0xff] %vm48, %v760
  %764 = vrot.lane.b32.xlu0 %v751, 96
  %v765 = vpop.permute.xlu0 %764
  %767 = vst.msk [vmem:[#allocation5] sm:$0xff] %vm48, %v765
  %s768 = scalar_lea.vmem [#allocation2], 56
  %769 = vst.msk [vmem:[%s768] sm:$0xff] %vm48, %v760
  %v770 = vld [vmem:[#allocation4] sm:$0xff]
  %771 = vst.msk [vmem:[%s7] sm:$0xff] %vm48, %v770
  %v772 = vld [vmem:[#allocation5] sm:$0xff]
  %773 = vst.msk [vmem:[%s8] sm:$0xff] %vm48, %v772
  %v774 = vld [vmem:[%s4] sm:$0xff]
  %v775 = vld [vmem:[%s4 + $0x8] sm:$0xff]
  %v776 = vld [vmem:[%s4 + $0x10] sm:$0xff]
  %v777 = vld [vmem:[%s4 + $0x18] sm:$0xff]
  %v778 = vld [vmem:[%s5] sm:$0xff]
  %v779 = vld [vmem:[%s5 + $0x8] sm:$0xff]
  %v780 = vld [vmem:[%s5 + $0x10] sm:$0xff]
  %v781 = vld [vmem:[%s5 + $0x18] sm:$0xff]
  %v782 = vld [vmem:[%s6] sm:$0x1]
  %v783 = vld [vmem:[#allocation2] sm:$0xff]
  %v784 = vld [vmem:[#allocation2 + $0x8] sm:$0xff]
  %v785 = vld [vmem:[#allocation2 + $0x10] sm:$0xff]
  %v786 = vld [vmem:[#allocation2 + $0x18] sm:$0xff]
  %v787 = vld [vmem:[#allocation2 + $0x20] sm:$0xff]
  %v788 = vld [vmem:[#allocation2 + $0x28] sm:$0xff]
  %v789 = vld [vmem:[#allocation2 + $0x30] sm:$0xff]
  %v790 = vld [vmem:[#allocation2 + $0x38] sm:$0xff]
  %v792 = vperm.slane %v782, 0
  %v795 = vsel %vm48, %v783, 0
  %v798 = vsel %vm48, %v784, 0
  %v801 = vsel %vm48, %v785, 0
  %v804 = vsel %vm48, %v786, 0
  %v807 = vsel %vm48, %v787, 0
  %v810 = vsel %vm48, %v788, 0
  %v813 = vsel %vm48, %v789, 0
  %v816 = vsel %vm48, %v790, 0
  %818 = vmatpush.msra.mxu0 0.0
  %819 = vmatpush.msra.mxu0 0.0
  %820 = vmatpush.msra.mxu0 0.0
  %821 = vmatpush.msra.mxu0 0.0
  %822 = vmatpush.msra.mxu0 0.0
  %823 = vmatpush.msra.mxu0 0.0
  %824 = vmatpush.msra.mxu0 0.0
  %825 = vmatpush.msra.mxu0 0.0
  %826 = vmatpush.msra.mxu0 0.0
  %827 = vmatpush.msra.mxu0 0.0
  %828 = vmatpush.msra.mxu0 0.0
  %829 = vmatpush.msra.mxu0 0.0
  %830 = vmatpush.msra.mxu0 %v777
  %831 = vmatpush.msra.mxu0 %v776
  %832 = vmatpush.msra.mxu0 %v775
  %833 = vmatpush.msra.mxu0 %v774
  %834 = vmatmul.f32.gmra.mxu0 %v795
  %v835 = vpop.f32.mrf.mxu0
  %v836 = vadd.f32 %v792, %v835
  %837 = vmatmul.f32.gmra.mxu0 %v798
  %v838 = vpop.f32.mrf.mxu0
  %v839 = vadd.f32 %v792, %v838
  %840 = vmatmul.f32.gmra.mxu0 %v801
  %v841 = vpop.f32.mrf.mxu0
  %v842 = vadd.f32 %v792, %v841
  %843 = vmatmul.f32.gmra.mxu0 %v804
  %v844 = vpop.f32.mrf.mxu0
  %v845 = vadd.f32 %v792, %v844
  %846 = vmatmul.f32.gmra.mxu0 %v807
  %v847 = vpop.f32.mrf.mxu0
  %v848 = vadd.f32 %v792, %v847
  %849 = vmatmul.f32.gmra.mxu0 %v810
  %v850 = vpop.f32.mrf.mxu0
  %v851 = vadd.f32 %v792, %v850
  %852 = vmatmul.f32.gmra.mxu0 %v813
  %v853 = vpop.f32.mrf.mxu0
  %v854 = vadd.f32 %v792, %v853
  %855 = vmatmul.f32.gmra.mxu0 %v816
  %v856 = vpop.f32.mrf.mxu0
  %v857 = vadd.f32 %v792, %v856
  %858 = vdwg.mxu0
  %859 = vst [vmem:[#allocation3] sm:$0xff] %v836
  %860 = vst [vmem:[#allocation3 + $0x8] sm:$0xff] %v839
  %861 = vst [vmem:[#allocation3 + $0x10] sm:$0xff] %v842
  %862 = vst [vmem:[#allocation3 + $0x18] sm:$0xff] %v845
  %863 = vst [vmem:[#allocation3 + $0x20] sm:$0xff] %v848
  %864 = vst [vmem:[#allocation3 + $0x28] sm:$0xff] %v851
  %865 = vst [vmem:[#allocation3 + $0x30] sm:$0xff] %v854
  %866 = vst [vmem:[#allocation3 + $0x38] sm:$0xff] %v857
  %867 = vst.msk [vmem:[#allocation4] sm:$0xff] %vm48, 0.0
  %868 = vst.msk [vmem:[#allocation5] sm:$0xff] %vm48, 0.0
  %v869 = vld [vmem:[#allocation4] sm:$0xff]
  %v870 = vld [vmem:[#allocation5] sm:$0xff]
  %v871 = vld [vmem:[#allocation3] sm:$0xff]
  %v873 = vsel %vm48, %v869, 0
  %875 = vmatpush.msra.mxu0 0.0
  %876 = vmatpush.msra.mxu0 0.0
  %877 = vmatpush.msra.mxu0 0.0
  %878 = vmatpush.msra.mxu0 0.0
  %879 = vmatpush.msra.mxu0 0.0
  %880 = vmatpush.msra.mxu0 0.0
  %881 = vmatpush.msra.mxu0 0.0
  %882 = vmatpush.msra.mxu0 0.0
  %883 = vmatpush.msra.mxu0 0.0
  %884 = vmatpush.msra.mxu0 0.0
  %885 = vmatpush.msra.mxu0 0.0
  %886 = vmatpush.msra.mxu0 0.0
  %887 = vmatpush.msra.mxu0 %v781
  %888 = vmatpush.msra.mxu0 %v780
  %889 = vmatpush.msra.mxu0 %v779
  %890 = vmatpush.msra.mxu0 %v778
  %891 = vmatmul.f32.gmra.mxu0 %v873
  %v892 = vpop.f32.mrf.mxu0
  %v893 = vadd.f32 0.0, %v892
  %894 = vdwg.mxu0
  %v895 = vadd.f32 %v871, %v893
  %v896 = vxor.u32 %v895, 2147483648
  %v897 = vmul.f32 %v896, 1.442695
  %v898 = vpow.pop %v897
  %v899 = vadd.f32 %v898, 1.0
  %v900 = vrcp.pop %v899
  %v901 = vmul.f32 %v899, %v900
  %v902 = vsub.f32 1.0, %v901
  %v903 = vmul.f32 %v900, %v902
  %v904 = vadd.f32 %v900, %v903
  %vm905 = vweird.f32 %v899
  %vm906 = vweird.f32 %v900
  %vm907 = vmor %vm905, %vm906
  %v908 = vsel %vm907, %v900, %v904
  %v909 = vand.u32 2147483647, %v899
  %vm910 = vcmp.eq.f32.partialorder %v909, 8.507059e+37
  %v911 = vand.u32 %v899, 2147483648
  %v912 = vor.u32 1.1754944e-38, %v911
  %v913 = vsel %vm910, %v912, %v908
  %v914 = vmul.f32 1.0, %v913
  %v915 = vtanh.pop %v895
  %917 = vrot.lane.b32.xlu0 %v870, 32
  %v918 = vpop.permute.xlu0 %917
  %v920 = vmul.f32 %v914, %v918
  %922 = vrot.lane.b32.xlu0 %v915, 64
  %v923 = vpop.permute.xlu0 %922
  %v925 = vmul.f32 %v914, %v923
  %927 = vrot.lane.b32.xlu0 %v925, 32
  %v928 = vpop.permute.xlu0 %927
  %v930 = vadd.f32 %v920, %v928
  %v931 = vtanh.pop %v930
  %933 = vrot.lane.b32.xlu0 %v931, 64
  %v934 = vpop.permute.xlu0 %933
  %v936 = vmul.f32 %v914, %v934
  %938 = vrot.lane.b32.xlu0 %v936, 32
  %v939 = vpop.permute.xlu0 %938
  %941 = vst.msk [vmem:[#allocation4] sm:$0xff] %vm48, %v939
  %943 = vrot.lane.b32.xlu0 %v930, 96
  %v944 = vpop.permute.xlu0 %943
  %946 = vst.msk [vmem:[#allocation5] sm:$0xff] %vm48, %v944
  %v947 = vld [vmem:[#allocation4] sm:$0xff]
  %v948 = vld [vmem:[#allocation5] sm:$0xff]
  %v949 = vld [vmem:[%s205] sm:$0xff]
  %v951 = vsel %vm48, %v947, 0
  %953 = vmatpush.msra.mxu0 0.0
  %954 = vmatpush.msra.mxu0 0.0
  %955 = vmatpush.msra.mxu0 0.0
  %956 = vmatpush.msra.mxu0 0.0
  %957 = vmatpush.msra.mxu0 0.0
  %958 = vmatpush.msra.mxu0 0.0
  %959 = vmatpush.msra.mxu0 0.0
  %960 = vmatpush.msra.mxu0 0.0
  %961 = vmatpush.msra.mxu0 0.0
  %962 = vmatpush.msra.mxu0 0.0
  %963 = vmatpush.msra.mxu0 0.0
  %964 = vmatpush.msra.mxu0 0.0
  %965 = vmatpush.msra.mxu0 %v781
  %966 = vmatpush.msra.mxu0 %v780
  %967 = vmatpush.msra.mxu0 %v779
  %968 = vmatpush.msra.mxu0 %v778
  %969 = vmatmul.f32.gmra.mxu0 %v951
  %v970 = vpop.f32.mrf.mxu0
  %v971 = vadd.f32 0.0, %v970
  %972 = vdwg.mxu0
  %v973 = vadd.f32 %v949, %v971
  %v974 = vxor.u32 %v973, 2147483648
  %v975 = vmul.f32 %v974, 1.442695
  %v976 = vpow.pop %v975
  %v977 = vadd.f32 %v976, 1.0
  %v978 = vrcp.pop %v977
  %v979 = vmul.f32 %v977, %v978
  %v980 = vsub.f32 1.0, %v979
  %v981 = vmul.f32 %v978, %v980
  %v982 = vadd.f32 %v978, %v981
  %vm983 = vweird.f32 %v977
  %vm984 = vweird.f32 %v978
  %vm985 = vmor %vm983, %vm984
  %v986 = vsel %vm985, %v978, %v982
  %v987 = vand.u32 2147483647, %v977
  %vm988 = vcmp.eq.f32.partialorder %v987, 8.507059e+37
  %v989 = vand.u32 %v977, 2147483648
  %v990 = vor.u32 1.1754944e-38, %v989
  %v991 = vsel %vm988, %v990, %v986
  %v992 = vmul.f32 1.0, %v991
  %v993 = vtanh.pop %v973
  %995 = vrot.lane.b32.xlu0 %v948, 32
  %v996 = vpop.permute.xlu0 %995
  %v998 = vmul.f32 %v992, %v996
  %1000 = vrot.lane.b32.xlu0 %v993, 64
  %v1001 = vpop.permute.xlu0 %1000
  %v1003 = vmul.f32 %v992, %v1001
  %1005 = vrot.lane.b32.xlu0 %v1003, 32
  %v1006 = vpop.permute.xlu0 %1005
  %v1008 = vadd.f32 %v998, %v1006
  %v1009 = vtanh.pop %v1008
  %1011 = vrot.lane.b32.xlu0 %v1009, 64
  %v1012 = vpop.permute.xlu0 %1011
  %v1014 = vmul.f32 %v992, %v1012
  %1016 = vrot.lane.b32.xlu0 %v1014, 32
  %v1017 = vpop.permute.xlu0 %1016
  %1019 = vst.msk [vmem:[#allocation4] sm:$0xff] %vm48, %v1017
  %1021 = vrot.lane.b32.xlu0 %v1008, 96
  %v1022 = vpop.permute.xlu0 %1021
  %1024 = vst.msk [vmem:[#allocation5] sm:$0xff] %vm48, %v1022
  %v1025 = vld [vmem:[#allocation4] sm:$0xff]
  %v1026 = vld [vmem:[#allocation5] sm:$0xff]
  %v1027 = vld [vmem:[%s286] sm:$0xff]
  %v1029 = vsel %vm48, %v1025, 0
  %1031 = vmatpush.msra.mxu0 0.0
  %1032 = vmatpush.msra.mxu0 0.0
  %1033 = vmatpush.msra.mxu0 0.0
  %1034 = vmatpush.msra.mxu0 0.0
  %1035 = vmatpush.msra.mxu0 0.0
  %1036 = vmatpush.msra.mxu0 0.0
  %1037 = vmatpush.msra.mxu0 0.0
  %1038 = vmatpush.msra.mxu0 0.0
  %1039 = vmatpush.msra.mxu0 0.0
  %1040 = vmatpush.msra.mxu0 0.0
  %1041 = vmatpush.msra.mxu0 0.0
  %1042 = vmatpush.msra.mxu0 0.0
  %1043 = vmatpush.msra.mxu0 %v781
  %1044 = vmatpush.msra.mxu0 %v780
  %1045 = vmatpush.msra.mxu0 %v779
  %1046 = vmatpush.msra.mxu0 %v778
  %1047 = vmatmul.f32.gmra.mxu0 %v1029
  %v1048 = vpop.f32.mrf.mxu0
  %v1049 = vadd.f32 0.0, %v1048
  %1050 = vdwg.mxu0
  %v1051 = vadd.f32 %v1027, %v1049
  %v1052 = vxor.u32 %v1051, 2147483648
  %v1053 = vmul.f32 %v1052, 1.442695
  %v1054 = vpow.pop %v1053
  %v1055 = vadd.f32 %v1054, 1.0
  %v1056 = vrcp.pop %v1055
  %v1057 = vmul.f32 %v1055, %v1056
  %v1058 = vsub.f32 1.0, %v1057
  %v1059 = vmul.f32 %v1056, %v1058
  %v1060 = vadd.f32 %v1056, %v1059
  %vm1061 = vweird.f32 %v1055
  %vm1062 = vweird.f32 %v1056
  %vm1063 = vmor %vm1061, %vm1062
  %v1064 = vsel %vm1063, %v1056, %v1060
  %v1065 = vand.u32 2147483647, %v1055
  %vm1066 = vcmp.eq.f32.partialorder %v1065, 8.507059e+37
  %v1067 = vand.u32 %v1055, 2147483648
  %v1068 = vor.u32 1.1754944e-38, %v1067
  %v1069 = vsel %vm1066, %v1068, %v1064
  %v1070 = vmul.f32 1.0, %v1069
  %v1071 = vtanh.pop %v1051
  %1073 = vrot.lane.b32.xlu0 %v1026, 32
  %v1074 = vpop.permute.xlu0 %1073
  %v1076 = vmul.f32 %v1070, %v1074
  %1078 = vrot.lane.b32.xlu0 %v1071, 64
  %v1079 = vpop.permute.xlu0 %1078
  %v1081 = vmul.f32 %v1070, %v1079
  %1083 = vrot.lane.b32.xlu0 %v1081, 32
  %v1084 = vpop.permute.xlu0 %1083
  %v1086 = vadd.f32 %v1076, %v1084
  %v1087 = vtanh.pop %v1086
  %1089 = vrot.lane.b32.xlu0 %v1087, 64
  %v1090 = vpop.permute.xlu0 %1089
  %v1092 = vmul.f32 %v1070, %v1090
  %1094 = vrot.lane.b32.xlu0 %v1092, 32
  %v1095 = vpop.permute.xlu0 %1094
  %1097 = vst.msk [vmem:[#allocation4] sm:$0xff] %vm48, %v1095
  %1099 = vrot.lane.b32.xlu0 %v1086, 96
  %v1100 = vpop.permute.xlu0 %1099
  %1102 = vst.msk [vmem:[#allocation5] sm:$0xff] %vm48, %v1100
  %v1103 = vld [vmem:[#allocation4] sm:$0xff]
  %v1104 = vld [vmem:[#allocation5] sm:$0xff]
  %v1105 = vld [vmem:[%s367] sm:$0xff]
  %v1107 = vsel %vm48, %v1103, 0
  %1109 = vmatpush.msra.mxu0 0.0
  %1110 = vmatpush.msra.mxu0 0.0
  %1111 = vmatpush.msra.mxu0 0.0
  %1112 = vmatpush.msra.mxu0 0.0
  %1113 = vmatpush.msra.mxu0 0.0
  %1114 = vmatpush.msra.mxu0 0.0
  %1115 = vmatpush.msra.mxu0 0.0
  %1116 = vmatpush.msra.mxu0 0.0
  %1117 = vmatpush.msra.mxu0 0.0
  %1118 = vmatpush.msra.mxu0 0.0
  %1119 = vmatpush.msra.mxu0 0.0
  %1120 = vmatpush.msra.mxu0 0.0
  %1121 = vmatpush.msra.mxu0 %v781
  %1122 = vmatpush.msra.mxu0 %v780
  %1123 = vmatpush.msra.mxu0 %v779
  %1124 = vmatpush.msra.mxu0 %v778
  %1125 = vmatmul.f32.gmra.mxu0 %v1107
  %v1126 = vpop.f32.mrf.mxu0
  %v1127 = vadd.f32 0.0, %v1126
  %1128 = vdwg.mxu0
  %v1129 = vadd.f32 %v1105, %v1127
  %v1130 = vxor.u32 %v1129, 2147483648
  %v1131 = vmul.f32 %v1130, 1.442695
  %v1132 = vpow.pop %v1131
  %v1133 = vadd.f32 %v1132, 1.0
  %v1134 = vrcp.pop %v1133
  %v1135 = vmul.f32 %v1133, %v1134
  %v1136 = vsub.f32 1.0, %v1135
  %v1137 = vmul.f32 %v1134, %v1136
  %v1138 = vadd.f32 %v1134, %v1137
  %vm1139 = vweird.f32 %v1133
  %vm1140 = vweird.f32 %v1134
  %vm1141 = vmor %vm1139, %vm1140
  %v1142 = vsel %vm1141, %v1134, %v1138
  %v1143 = vand.u32 2147483647, %v1133
  %vm1144 = vcmp.eq.f32.partialorder %v1143, 8.507059e+37
  %v1145 = vand.u32 %v1133, 2147483648
  %v1146 = vor.u32 1.1754944e-38, %v1145
  %v1147 = vsel %vm1144, %v1146, %v1142
  %v1148 = vmul.f32 1.0, %v1147
  %v1149 = vtanh.pop %v1129
  %1151 = vrot.lane.b32.xlu0 %v1104, 32
  %v1152 = vpop.permute.xlu0 %1151
  %v1154 = vmul.f32 %v1148, %v1152
  %1156 = vrot.lane.b32.xlu0 %v1149, 64
  %v1157 = vpop.permute.xlu0 %1156
  %v1159 = vmul.f32 %v1148, %v1157
  %1161 = vrot.lane.b32.xlu0 %v1159, 32
  %v1162 = vpop.permute.xlu0 %1161
  %v1164 = vadd.f32 %v1154, %v1162
  %v1165 = vtanh.pop %v1164
  %1167 = vrot.lane.b32.xlu0 %v1165, 64
  %v1168 = vpop.permute.xlu0 %1167
  %v1170 = vmul.f32 %v1148, %v1168
  %1172 = vrot.lane.b32.xlu0 %v1170, 32
  %v1173 = vpop.permute.xlu0 %1172
  %1175 = vst.msk [vmem:[#allocation4] sm:$0xff] %vm48, %v1173
  %1177 = vrot.lane.b32.xlu0 %v1164, 96
  %v1178 = vpop.permute.xlu0 %1177
  %1180 = vst.msk [vmem:[#allocation5] sm:$0xff] %vm48, %v1178
  %v1181 = vld [vmem:[#allocation4] sm:$0xff]
  %v1182 = vld [vmem:[#allocation5] sm:$0xff]
  %v1183 = vld [vmem:[%s448] sm:$0xff]
  %v1185 = vsel %vm48, %v1181, 0
  %1187 = vmatpush.msra.mxu0 0.0
  %1188 = vmatpush.msra.mxu0 0.0
  %1189 = vmatpush.msra.mxu0 0.0
  %1190 = vmatpush.msra.mxu0 0.0
  %1191 = vmatpush.msra.mxu0 0.0
  %1192 = vmatpush.msra.mxu0 0.0
  %1193 = vmatpush.msra.mxu0 0.0
  %1194 = vmatpush.msra.mxu0 0.0
  %1195 = vmatpush.msra.mxu0 0.0
  %1196 = vmatpush.msra.mxu0 0.0
  %1197 = vmatpush.msra.mxu0 0.0
  %1198 = vmatpush.msra.mxu0 0.0
  %1199 = vmatpush.msra.mxu0 %v781
  %1200 = vmatpush.msra.mxu0 %v780
  %1201 = vmatpush.msra.mxu0 %v779
  %1202 = vmatpush.msra.mxu0 %v778
  %1203 = vmatmul.f32.gmra.mxu0 %v1185
  %v1204 = vpop.f32.mrf.mxu0
  %v1205 = vadd.f32 0.0, %v1204
  %1206 = vdwg.mxu0
  %v1207 = vadd.f32 %v1183, %v1205
  %v1208 = vxor.u32 %v1207, 2147483648
  %v1209 = vmul.f32 %v1208, 1.442695
  %v1210 = vpow.pop %v1209
  %v1211 = vadd.f32 %v1210, 1.0
  %v1212 = vrcp.pop %v1211
  %v1213 = vmul.f32 %v1211, %v1212
  %v1214 = vsub.f32 1.0, %v1213
  %v1215 = vmul.f32 %v1212, %v1214
  %v1216 = vadd.f32 %v1212, %v1215
  %vm1217 = vweird.f32 %v1211
  %vm1218 = vweird.f32 %v1212
  %vm1219 = vmor %vm1217, %vm1218
  %v1220 = vsel %vm1219, %v1212, %v1216
  %v1221 = vand.u32 2147483647, %v1211
  %vm1222 = vcmp.eq.f32.partialorder %v1221, 8.507059e+37
  %v1223 = vand.u32 %v1211, 2147483648
  %v1224 = vor.u32 1.1754944e-38, %v1223
  %v1225 = vsel %vm1222, %v1224, %v1220
  %v1226 = vmul.f32 1.0, %v1225
  %v1227 = vtanh.pop %v1207
  %1229 = vrot.lane.b32.xlu0 %v1182, 32
  %v1230 = vpop.permute.xlu0 %1229
  %v1232 = vmul.f32 %v1226, %v1230
  %1234 = vrot.lane.b32.xlu0 %v1227, 64
  %v1235 = vpop.permute.xlu0 %1234
  %v1237 = vmul.f32 %v1226, %v1235
  %1239 = vrot.lane.b32.xlu0 %v1237, 32
  %v1240 = vpop.permute.xlu0 %1239
  %v1242 = vadd.f32 %v1232, %v1240
  %v1243 = vtanh.pop %v1242
  %1245 = vrot.lane.b32.xlu0 %v1243, 64
  %v1246 = vpop.permute.xlu0 %1245
  %v1248 = vmul.f32 %v1226, %v1246
  %1250 = vrot.lane.b32.xlu0 %v1248, 32
  %v1251 = vpop.permute.xlu0 %1250
  %1253 = vst.msk [vmem:[#allocation4] sm:$0xff] %vm48, %v1251
  %1255 = vrot.lane.b32.xlu0 %v1242, 96
  %v1256 = vpop.permute.xlu0 %1255
  %1258 = vst.msk [vmem:[#allocation5] sm:$0xff] %vm48, %v1256
  %v1259 = vld [vmem:[#allocation4] sm:$0xff]
  %v1260 = vld [vmem:[#allocation5] sm:$0xff]
  %v1261 = vld [vmem:[%s529] sm:$0xff]
  %v1263 = vsel %vm48, %v1259, 0
  %1265 = vmatpush.msra.mxu0 0.0
  %1266 = vmatpush.msra.mxu0 0.0
  %1267 = vmatpush.msra.mxu0 0.0
  %1268 = vmatpush.msra.mxu0 0.0
  %1269 = vmatpush.msra.mxu0 0.0
  %1270 = vmatpush.msra.mxu0 0.0
  %1271 = vmatpush.msra.mxu0 0.0
  %1272 = vmatpush.msra.mxu0 0.0
  %1273 = vmatpush.msra.mxu0 0.0
  %1274 = vmatpush.msra.mxu0 0.0
  %1275 = vmatpush.msra.mxu0 0.0
  %1276 = vmatpush.msra.mxu0 0.0
  %1277 = vmatpush.msra.mxu0 %v781
  %1278 = vmatpush.msra.mxu0 %v780
  %1279 = vmatpush.msra.mxu0 %v779
  %1280 = vmatpush.msra.mxu0 %v778
  %1281 = vmatmul.f32.gmra.mxu0 %v1263
  %v1282 = vpop.f32.mrf.mxu0
  %v1283 = vadd.f32 0.0, %v1282
  %1284 = vdwg.mxu0
  %v1285 = vadd.f32 %v1261, %v1283
  %v1286 = vxor.u32 %v1285, 2147483648
  %v1287 = vmul.f32 %v1286, 1.442695
  %v1288 = vpow.pop %v1287
  %v1289 = vadd.f32 %v1288, 1.0
  %v1290 = vrcp.pop %v1289
  %v1291 = vmul.f32 %v1289, %v1290
  %v1292 = vsub.f32 1.0, %v1291
  %v1293 = vmul.f32 %v1290, %v1292
  %v1294 = vadd.f32 %v1290, %v1293
  %vm1295 = vweird.f32 %v1289
  %vm1296 = vweird.f32 %v1290
  %vm1297 = vmor %vm1295, %vm1296
  %v1298 = vsel %vm1297, %v1290, %v1294
  %v1299 = vand.u32 2147483647, %v1289
  %vm1300 = vcmp.eq.f32.partialorder %v1299, 8.507059e+37
  %v1301 = vand.u32 %v1289, 2147483648
  %v1302 = vor.u32 1.1754944e-38, %v1301
  %v1303 = vsel %vm1300, %v1302, %v1298
  %v1304 = vmul.f32 1.0, %v1303
  %v1305 = vtanh.pop %v1285
  %1307 = vrot.lane.b32.xlu0 %v1260, 32
  %v1308 = vpop.permute.xlu0 %1307
  %v1310 = vmul.f32 %v1304, %v1308
  %1312 = vrot.lane.b32.xlu0 %v1305, 64
  %v1313 = vpop.permute.xlu0 %1312
  %v1315 = vmul.f32 %v1304, %v1313
  %1317 = vrot.lane.b32.xlu0 %v1315, 32
  %v1318 = vpop.permute.xlu0 %1317
  %v1320 = vadd.f32 %v1310, %v1318
  %v1321 = vtanh.pop %v1320
  %1323 = vrot.lane.b32.xlu0 %v1321, 64
  %v1324 = vpop.permute.xlu0 %1323
  %v1326 = vmul.f32 %v1304, %v1324
  %1328 = vrot.lane.b32.xlu0 %v1326, 32
  %v1329 = vpop.permute.xlu0 %1328
  %1331 = vst.msk [vmem:[#allocation4] sm:$0xff] %vm48, %v1329
  %1333 = vrot.lane.b32.xlu0 %v1320, 96
  %v1334 = vpop.permute.xlu0 %1333
  %1336 = vst.msk [vmem:[#allocation5] sm:$0xff] %vm48, %v1334
  %v1337 = vld [vmem:[#allocation4] sm:$0xff]
  %v1338 = vld [vmem:[#allocation5] sm:$0xff]
  %v1339 = vld [vmem:[%s610] sm:$0xff]
  %v1341 = vsel %vm48, %v1337, 0
  %1343 = vmatpush.msra.mxu0 0.0
  %1344 = vmatpush.msra.mxu0 0.0
  %1345 = vmatpush.msra.mxu0 0.0
  %1346 = vmatpush.msra.mxu0 0.0
  %1347 = vmatpush.msra.mxu0 0.0
  %1348 = vmatpush.msra.mxu0 0.0
  %1349 = vmatpush.msra.mxu0 0.0
  %1350 = vmatpush.msra.mxu0 0.0
  %1351 = vmatpush.msra.mxu0 0.0
  %1352 = vmatpush.msra.mxu0 0.0
  %1353 = vmatpush.msra.mxu0 0.0
  %1354 = vmatpush.msra.mxu0 0.0
  %1355 = vmatpush.msra.mxu0 %v781
  %1356 = vmatpush.msra.mxu0 %v780
  %1357 = vmatpush.msra.mxu0 %v779
  %1358 = vmatpush.msra.mxu0 %v778
  %1359 = vmatmul.f32.gmra.mxu0 %v1341
  %v1360 = vpop.f32.mrf.mxu0
  %v1361 = vadd.f32 0.0, %v1360
  %1362 = vdwg.mxu0
  %v1363 = vadd.f32 %v1339, %v1361
  %v1364 = vxor.u32 %v1363, 2147483648
  %v1365 = vmul.f32 %v1364, 1.442695
  %v1366 = vpow.pop %v1365
  %v1367 = vadd.f32 %v1366, 1.0
  %v1368 = vrcp.pop %v1367
  %v1369 = vmul.f32 %v1367, %v1368
  %v1370 = vsub.f32 1.0, %v1369
  %v1371 = vmul.f32 %v1368, %v1370
  %v1372 = vadd.f32 %v1368, %v1371
  %vm1373 = vweird.f32 %v1367
  %vm1374 = vweird.f32 %v1368
  %vm1375 = vmor %vm1373, %vm1374
  %v1376 = vsel %vm1375, %v1368, %v1372
  %v1377 = vand.u32 2147483647, %v1367
  %vm1378 = vcmp.eq.f32.partialorder %v1377, 8.507059e+37
  %v1379 = vand.u32 %v1367, 2147483648
  %v1380 = vor.u32 1.1754944e-38, %v1379
  %v1381 = vsel %vm1378, %v1380, %v1376
  %v1382 = vmul.f32 1.0, %v1381
  %v1383 = vtanh.pop %v1363
  %1385 = vrot.lane.b32.xlu0 %v1338, 32
  %v1386 = vpop.permute.xlu0 %1385
  %v1388 = vmul.f32 %v1382, %v1386
  %1390 = vrot.lane.b32.xlu0 %v1383, 64
  %v1391 = vpop.permute.xlu0 %1390
  %v1393 = vmul.f32 %v1382, %v1391
  %1395 = vrot.lane.b32.xlu0 %v1393, 32
  %v1396 = vpop.permute.xlu0 %1395
  %v1398 = vadd.f32 %v1388, %v1396
  %v1399 = vtanh.pop %v1398
  %1401 = vrot.lane.b32.xlu0 %v1399, 64
  %v1402 = vpop.permute.xlu0 %1401
  %v1404 = vmul.f32 %v1382, %v1402
  %1406 = vrot.lane.b32.xlu0 %v1404, 32
  %v1407 = vpop.permute.xlu0 %1406
  %1409 = vst.msk [vmem:[#allocation4] sm:$0xff] %vm48, %v1407
  %1411 = vrot.lane.b32.xlu0 %v1398, 96
  %v1412 = vpop.permute.xlu0 %1411
  %1414 = vst.msk [vmem:[#allocation5] sm:$0xff] %vm48, %v1412
  %v1415 = vld [vmem:[#allocation4] sm:$0xff]
  %v1416 = vld [vmem:[#allocation5] sm:$0xff]
  %v1417 = vld [vmem:[%s691] sm:$0xff]
  %v1419 = vsel %vm48, %v1415, 0
  %1421 = vmatpush.msra.mxu0 0.0
  %1422 = vmatpush.msra.mxu0 0.0
  %1423 = vmatpush.msra.mxu0 0.0
  %1424 = vmatpush.msra.mxu0 0.0
  %1425 = vmatpush.msra.mxu0 0.0
  %1426 = vmatpush.msra.mxu0 0.0
  %1427 = vmatpush.msra.mxu0 0.0
  %1428 = vmatpush.msra.mxu0 0.0
  %1429 = vmatpush.msra.mxu0 0.0
  %1430 = vmatpush.msra.mxu0 0.0
  %1431 = vmatpush.msra.mxu0 0.0
  %1432 = vmatpush.msra.mxu0 0.0
  %1433 = vmatpush.msra.mxu0 %v781
  %1434 = vmatpush.msra.mxu0 %v780
  %1435 = vmatpush.msra.mxu0 %v779
  %1436 = vmatpush.msra.mxu0 %v778
  %1437 = vmatmul.f32.gmra.mxu0 %v1419
  %v1438 = vpop.f32.mrf.mxu0
  %v1439 = vadd.f32 0.0, %v1438
  %1440 = vdwg.mxu0
  %v1441 = vadd.f32 %v1417, %v1439
  %v1442 = vxor.u32 %v1441, 2147483648
  %v1443 = vmul.f32 %v1442, 1.442695
  %v1444 = vpow.pop %v1443
  %v1445 = vadd.f32 %v1444, 1.0
  %v1446 = vrcp.pop %v1445
  %v1447 = vmul.f32 %v1445, %v1446
  %v1448 = vsub.f32 1.0, %v1447
  %v1449 = vmul.f32 %v1446, %v1448
  %v1450 = vadd.f32 %v1446, %v1449
  %vm1451 = vweird.f32 %v1445
  %vm1452 = vweird.f32 %v1446
  %vm1453 = vmor %vm1451, %vm1452
  %v1454 = vsel %vm1453, %v1446, %v1450
  %v1455 = vand.u32 2147483647, %v1445
  %vm1456 = vcmp.eq.f32.partialorder %v1455, 8.507059e+37
  %v1457 = vand.u32 %v1445, 2147483648
  %v1458 = vor.u32 1.1754944e-38, %v1457
  %v1459 = vsel %vm1456, %v1458, %v1454
  %v1460 = vmul.f32 1.0, %v1459
  %v1461 = vtanh.pop %v1441
  %1463 = vrot.lane.b32.xlu0 %v1416, 32
  %v1464 = vpop.permute.xlu0 %1463
  %v1466 = vmul.f32 %v1460, %v1464
  %1468 = vrot.lane.b32.xlu0 %v1461, 64
  %v1469 = vpop.permute.xlu0 %1468
  %v1471 = vmul.f32 %v1460, %v1469
  %1473 = vrot.lane.b32.xlu0 %v1471, 32
  %v1474 = vpop.permute.xlu0 %1473
  %v1476 = vadd.f32 %v1466, %v1474
  %v1477 = vtanh.pop %v1476
  %1479 = vrot.lane.b32.xlu0 %v1477, 64
  %v1480 = vpop.permute.xlu0 %1479
  %v1482 = vmul.f32 %v1460, %v1480
  %1484 = vrot.lane.b32.xlu0 %v1482, 32
  %v1485 = vpop.permute.xlu0 %1484
  %1487 = vst.msk [vmem:[#allocation4] sm:$0xff] %vm48, %v1485
  %1489 = vrot.lane.b32.xlu0 %v1476, 96
  %v1490 = vpop.permute.xlu0 %1489
  %1492 = vst.msk [vmem:[#allocation5] sm:$0xff] %vm48, %v1490
  %v1493 = vld [vmem:[#allocation4] sm:$0xff]
  %s1494 = scalar_lea.vmem %s7, 8
  %1495 = vst.msk [vmem:[%s1494] sm:$0xff] %vm48, %v1493
  %v1496 = vld [vmem:[#allocation5] sm:$0xff]
  %s1497 = scalar_lea.vmem %s8, 8
  %1498 = vst.msk [vmem:[%s1497] sm:$0xff] %vm48, %v1496
  // Predicated region
  $region30: #{encoder_forward.1} parent=0 // pred_check
    _
  $region31: #{encoder_forward.1} parent=0 // pred_check_branch
    %1500 = sbr.rel (0) target = $region33
  $region32: #{encoder_forward.1} parent=0 // pred_region
    _
  $region33: #{encoder_forward.1} parent=0 // pred_fallthru
    _
  // Predicated region
  $region34: #{encoder_forward.1} parent=0 // pred_check
    _
  $region35: #{encoder_forward.1} parent=0 // pred_check_branch
    %1502 = sbr.rel (0) target = $region37
  $region36: #{encoder_forward.1} parent=0 // pred_region
    _
  $region37: #{encoder_forward.1} parent=0 // pred_fallthru
    _
  // Predicated region
  $region38: #{encoder_forward.1} parent=0 // pred_check
    _
  $region39: #{encoder_forward.1} parent=0 // pred_check_branch
    %1504 = sbr.rel (0) target = $region41
  $region40: #{encoder_forward.1} parent=0 // pred_region
    _
  $region41: #{encoder_forward.1} parent=0 // pred_fallthru
    _
  // Predicated region
  $region42: #{encoder_forward.1} parent=0 // pred_check
    _
  $region43: #{encoder_forward.1} parent=0 // pred_check_branch
    %1506 = sbr.rel (0) target = $region45
  $region44: #{encoder_forward.1} parent=0 // pred_region
    _
  $region45: #{encoder_forward.1} parent=0 // pred_fallthru
    _

</llo_original>
